<compile_context>
chip_gen: v5e
topology: v5e:2x2
jax: 0.10.0
libtpu: 0.0.40
codegen_flags: <defaults>
</compile_context>

<pallas_src>
import numpy as np

import jax
import jax.numpy as jnp
from jax.experimental import pallas as pl
from jax.experimental.pallas import tpu as pltpu


def _zero_halo(ref):
    """Zero only the 1-px border of a padded VMEM scratch (interior is
    overwritten every step, so no full-buffer clear is needed)."""
    Hp, Wp, C = ref.shape
    ref[0:1, :, :] = jnp.zeros((1, Wp, C), ref.dtype)
    ref[Hp - 1:Hp, :, :] = jnp.zeros((1, Wp, C), ref.dtype)
    ref[:, 0:1, :] = jnp.zeros((Hp, 1, C), ref.dtype)
    ref[:, Wp - 1:Wp, :] = jnp.zeros((Hp, 1, C), ref.dtype)


def _upblock_kernel(x_ref, w1_ref, b1_ref, w2_ref, b2_ref, out_ref,
                    xpad_ref, midpad_ref, p1_ref, p2_ref):
    """One batch element per grid step, everything at PRE-upsample resolution.

    x_ref    : (1, H0, W0, Cin)        concat([attn, x]) in NHWC (no upsample)
    w1_ref   : (9*Cin, 4*Cmid)         conv1 weights with upsample + BN1 scale
                                       folded in (4 output phases stacked on N)
    b1_ref   : (1, 4*Cmid)             folded BN1 bias (tiled over phases)
    w2_ref   : (36*Cmid, 4*Cout)       conv2 weights in phase space + BN2 scale
    b2_ref   : (1, 4*Cout)             folded BN2 bias
    out_ref  : (1, H0*W0, 4*Cout)      4 phases of the 2x-upsampled output
    xpad_ref : VMEM (H0+2, W0+2, Cin)      zero-halo staging of the input
    midpad_ref: VMEM (H0+2, W0+2, 4*Cmid)  zero-halo staging of the mid tensor
    p1_ref   : VMEM (H0*W0, 9*Cin)         im2col patch for conv1
    p2_ref   : VMEM (H0*W0, 36*Cmid)       im2col patch for conv2
    """
    H0 = x_ref.shape[1]
    W0 = x_ref.shape[2]
    Cin = x_ref.shape[3]
    C1 = w1_ref.shape[1]          # 4 * Cmid (phase-stacked)
    HW = H0 * W0

    # ---- fused halo padding of the input (done in VMEM, never in HBM) ----
    _zero_halo(xpad_ref)
    xpad_ref[1:H0 + 1, 1:W0 + 1, :] = x_ref[0]

    # ---- conv1 (+ fused nearest-2x upsample): im2col + ONE MXU matmul ----
    t = 0
    for dh in range(3):
        for dw in range(3):
            p1_ref[:, t * Cin:(t + 1) * Cin] = (
                xpad_ref[dh:dh + H0, dw:dw + W0, :].reshape(HW, Cin))
            t += 1
    y1 = jnp.dot(p1_ref[...], w1_ref[...],
                 preferred_element_type=jnp.float32)
    y1 = jnp.maximum(y1 + b1_ref[0], 0.0)          # BN1 (scale folded) + ReLU

    # ---- stage mid (all 4 phases on the lane dim) with a zero halo ----
    _zero_halo(midpad_ref)
    midpad_ref[1:H0 + 1, 1:W0 + 1, :] = y1.reshape(H0, W0, C1)

    # ---- conv2 over all four output phases: im2col + ONE MXU matmul ----
    t = 0
    for dh in range(3):
        for dw in range(3):
            p2_ref[:, t * C1:(t + 1) * C1] = (
                midpad_ref[dh:dh + H0, dw:dw + W0, :].reshape(HW, C1))
            t += 1
    y2 = jnp.dot(p2_ref[...], w2_ref[...],
                 preferred_element_type=jnp.float32)
    out_ref[0] = jnp.maximum(y2 + b2_ref[0], 0.0)  # BN2 (scale folded) + ReLU


def _phase_weights(w1, w2, s1, s2):
    """Fold the nearest-2x upsample (and BN scales) into the conv weights.

    Output pixel (2i+a, 2j+b) of the upsampled-then-convolved image only ever
    reads pre-upsample pixels at offsets {-1,0,+1}; which original 3x3 tap maps
    to which offset depends only on the phase (a, b).  Both convs therefore
    become single matmuls over pre-upsample-resolution im2col patches, with the
    four output phases stacked along the output-channel dim.
    """
    Cin, Cmid = w1.shape[2], w1.shape[3]
    Cout = w2.shape[3]

    # R[a, r_idx, dh] = 1 iff tap dh of output phase a reads source row i + (r_idx-1).
    R = np.zeros((2, 3, 3), np.float32)
    R[0, 0, 0] = 1.0
    R[0, 1, 1] = 1.0
    R[0, 1, 2] = 1.0
    R[1, 1, 0] = 1.0
    R[1, 1, 1] = 1.0
    R[1, 2, 2] = 1.0
    R = jnp.asarray(R)

    # conv1 (input is the pre-upsample tensor itself)
    w1h = jnp.einsum('arh,bsw,hwio->rsiabo', R, R, w1.astype(jnp.float32))
    w1h = w1h.reshape(9 * Cin, 4 * Cmid)
    w1h = w1h * jnp.tile(s1.astype(jnp.float32), 4)[None, :]

    # T[a, dh, a', r_idx] = 1 iff tap dh of output phase a reads source phase a'
    # at row offset (r_idx - 1).  (conv2's input lives in phase space.)
    T = np.zeros((2, 3, 2, 3), np.float32)
    T[0, 0, 1, 0] = 1.0
    T[0, 1, 0, 1] = 1.0
    T[0, 2, 1, 1] = 1.0
    T[1, 0, 0, 1] = 1.0
    T[1, 1, 1, 1] = 1.0
    T[1, 2, 0, 2] = 1.0
    T = jnp.asarray(T)

    w2h = jnp.einsum('ahpr,bwqs,hwio->rspqiabo', T, T, w2.astype(jnp.float32))
    w2h = w2h.reshape(36 * Cmid, 4 * Cout)
    w2h = w2h * jnp.tile(s2.astype(jnp.float32), 4)[None, :]
    return w1h, w2h


def upblock_forward(attn, x, params):
    """attn, x: NCHW float32.  Returns NCHW float32 (N, out_ch, 2H, 2W)."""
    (w1, g1, be1, rm1, rv1, w2, g2, be2, rm2, rv2) = params
    eps = 1e-5

    # Only the cheap pre-upsample concat + layout change happen in XLA; the
    # 4x upsample and the halo padding are fused into the kernel.
    cat = jnp.concatenate([attn, x], axis=1)                      # (N,Cin,H0,W0)
    xin = jnp.transpose(cat, (0, 2, 3, 1)).astype(jnp.float32)    # NHWC
    N, H0, W0, Cin = xin.shape
    Cmid = w1.shape[3]
    Cout = w2.shape[3]

    # Fold eval-mode BatchNorm into per-channel scale/shift; scale goes into
    # the conv weights, shift stays as a bias in the kernel.
    s1 = g1 / jnp.sqrt(rv1 + eps)
    b1 = be1 - rm1 * s1
    s2 = g2 / jnp.sqrt(rv2 + eps)
    b2 = be2 - rm2 * s2

    w1h, w2h = _phase_weights(w1, w2, s1, s2)     # (9Cin,4Cmid), (36Cmid,4Cout)
    bb1 = jnp.tile(b1.astype(jnp.float32), 4).reshape(1, 4 * Cmid)
    bb2 = jnp.tile(b2.astype(jnp.float32), 4).reshape(1, 4 * Cout)

    out = pl.pallas_call(
        _upblock_kernel,
        out_shape=jax.ShapeDtypeStruct((N, H0 * W0, 4 * Cout), jnp.float32),
        grid_spec=pltpu.PrefetchScalarGridSpec(
            num_scalar_prefetch=0,
            grid=(N,),
            in_specs=[
                pl.BlockSpec((1, H0, W0, Cin), lambda n: (n, 0, 0, 0)),
                pl.BlockSpec((9 * Cin, 4 * Cmid), lambda n: (0, 0)),
                pl.BlockSpec((1, 4 * Cmid), lambda n: (0, 0)),
                pl.BlockSpec((36 * Cmid, 4 * Cout), lambda n: (0, 0)),
                pl.BlockSpec((1, 4 * Cout), lambda n: (0, 0)),
            ],
            out_specs=pl.BlockSpec((1, H0 * W0, 4 * Cout),
                                   lambda n: (n, 0, 0)),
            scratch_shapes=[
                pltpu.VMEM((H0 + 2, W0 + 2, Cin), jnp.float32),
                pltpu.VMEM((H0 + 2, W0 + 2, 4 * Cmid), jnp.float32),
                pltpu.VMEM((H0 * W0, 9 * Cin), jnp.float32),
                pltpu.VMEM((H0 * W0, 36 * Cmid), jnp.float32),
            ],
        ),
        compiler_params=pltpu.CompilerParams(
            dimension_semantics=("parallel",)),
    )(xin, w1h, bb1, w2h, bb2)

    # Unpack the 4 output phases back to NCHW full resolution (layout plumbing
    # only; replaces the NHWC->NCHW transpose the old version needed anyway).
    out = out.reshape(N, H0, W0, 2, 2, Cout)
    out = jnp.transpose(out, (0, 5, 1, 3, 2, 4))
    return out.reshape(N, Cout, 2 * H0, 2 * W0)


def _reference_forward(attn, x, params):
    """Pure-JAX reference (lax conv) mirroring the PyTorch module in eval mode."""
    (w1, g1, be1, rm1, rv1, w2, g2, be2, rm2, rv2) = params
    eps = 1e-5
    cat = jnp.concatenate([attn, x], axis=1)
    up = jnp.repeat(jnp.repeat(cat, 2, axis=2), 2, axis=3)
    y = jnp.transpose(up, (0, 2, 3, 1))
    dn = ('NHWC', 'HWIO', 'NHWC')
    y = jax.lax.conv_general_dilated(y, w1, (1, 1), 'SAME',
                                     dimension_numbers=dn)
    y = (y - rm1) / jnp.sqrt(rv1 + eps) * g1 + be1
    y = jnp.maximum(y, 0.0)
    y = jax.lax.conv_general_dilated(y, w2, (1, 1), 'SAME',
                                     dimension_numbers=dn)
    y = (y - rm2) / jnp.sqrt(rv2 + eps) * g2 + be2
    y = jnp.maximum(y, 0.0)
    return jnp.transpose(y, (0, 3, 1, 2))


if __name__ == "__main__":
    key = jax.random.PRNGKey(0)
    k_attn, k_x, k_w1, k_w2 = jax.random.split(key, 4)

    # Small shapes consistent with UpBlock(in_ch_x=4, in_ch_g=4, out_ch=8).
    N, C_attn, C_x, C_out = 2, 4, 4, 8
    H0 = W0 = 8
    C_in = C_attn + C_x

    attn = jax.random.normal(k_attn, (N, C_attn, H0, W0), jnp.float32)
    x = jax.random.normal(k_x, (N, C_x, H0, W0), jnp.float32)

    # Deterministic parameters (HWIO conv weights, eval-mode BN stats).
    w1 = jax.random.normal(k_w1, (3, 3, C_in, C_out), jnp.float32) * 0.1
    w2 = jax.random.normal(k_w2, (3, 3, C_out, C_out), jnp.float32) * 0.1
    g1 = jnp.linspace(0.5, 1.5, C_out, dtype=jnp.float32)
    be1 = jnp.linspace(-0.1, 0.1, C_out, dtype=jnp.float32)
    rm1 = jnp.linspace(-0.2, 0.2, C_out, dtype=jnp.float32)
    rv1 = jnp.linspace(0.5, 1.5, C_out, dtype=jnp.float32)
    g2 = jnp.linspace(1.2, 0.8, C_out, dtype=jnp.float32)
    be2 = jnp.linspace(0.05, -0.05, C_out, dtype=jnp.float32)
    rm2 = jnp.linspace(0.1, -0.1, C_out, dtype=jnp.float32)
    rv2 = jnp.linspace(0.9, 1.1, C_out, dtype=jnp.float32)

    params = (w1, g1, be1, rm1, rv1, w2, g2, be2, rm2, rv2)

    out = upblock_forward(attn, x, params)
    out = jax.block_until_ready(out)

    ref = _reference_forward(attn, x, params)
    assert out.shape == (N, C_out, 2 * H0, 2 * W0), out.shape
    assert jnp.allclose(out, ref, atol=1e-3, rtol=1e-3), (
        float(jnp.max(jnp.abs(out - ref))))

    print("KERNEL_OK")
</pallas_src>

<mosaic_0001>
module attributes {stable_mosaic.version = 11 : i64} {
  func.func @_upblock_kernel(%arg0: i32, %arg1: memref<1x8x8x8xf32, #tpu.memory_space<vmem>>, %arg2: memref<72x32xf32, #tpu.memory_space<vmem>>, %arg3: memref<1x32xf32, #tpu.memory_space<vmem>>, %arg4: memref<288x32xf32, #tpu.memory_space<vmem>>, %arg5: memref<1x32xf32, #tpu.memory_space<vmem>>, %arg6: memref<1x64x32xf32, #tpu.memory_space<vmem>>, %arg7: memref<10x10x8xf32, #tpu.memory_space<vmem>>, %arg8: memref<10x10x32xf32, #tpu.memory_space<vmem>>, %arg9: memref<64x72xf32, #tpu.memory_space<vmem>>, %arg10: memref<64x288xf32, #tpu.memory_space<vmem>>) attributes {dimension_semantics = [#tpu.dimension_semantics<parallel>], iteration_bounds = array<i64: 2>, scalar_prefetch = 0 : i64, scratch_operands = 4 : i64, tpu.core_type = #tpu.core_type<tc>, window_params = [{transform_indices = @transform_0, window_bounds = array<i64: 1, 8, 8, 8>}, {pipeline_mode = #tpu.pipeline_mode<synchronous>, transform_indices = @transform_1, window_bounds = array<i64: 72, 32>}, {pipeline_mode = #tpu.pipeline_mode<synchronous>, transform_indices = @transform_2, window_bounds = array<i64: 1, 32>}, {pipeline_mode = #tpu.pipeline_mode<synchronous>, transform_indices = @transform_3, window_bounds = array<i64: 288, 32>}, {pipeline_mode = #tpu.pipeline_mode<synchronous>, transform_indices = @transform_4, window_bounds = array<i64: 1, 32>}, {transform_indices = @transform_5, window_bounds = array<i64: 1, 64, 32>}]} {
    %cst = arith.constant 0.000000e+00 : f32
    %0 = vector.broadcast %cst : f32 to vector<1x10x8xf32>
    %c0 = arith.constant 0 : index
    %c0_0 = arith.constant 0 : index
    %c0_1 = arith.constant 0 : index
    %1 = vector.load %arg7[%c0, %c0_0, %c0_1] : memref<10x10x8xf32, #tpu.memory_space<vmem>>, vector<1x10x8xf32>
    tpu.vector_store %arg7[%c0, %c0_0, %c0_1], %0 {strides = array<i32>} : memref<10x10x8xf32, #tpu.memory_space<vmem>>, vector<1x10x8xf32>,
    %cst_2 = arith.constant 0.000000e+00 : f32
    %2 = vector.broadcast %cst_2 : f32 to vector<1x10x8xf32>
    %c9 = arith.constant 9 : index
    %c0_3 = arith.constant 0 : index
    %c0_4 = arith.constant 0 : index
    %3 = vector.load %arg7[%c9, %c0_3, %c0_4] : memref<10x10x8xf32, #tpu.memory_space<vmem>>, vector<1x10x8xf32>
    tpu.vector_store %arg7[%c9, %c0_3, %c0_4], %2 {strides = array<i32>} : memref<10x10x8xf32, #tpu.memory_space<vmem>>, vector<1x10x8xf32>,
    %cst_5 = arith.constant 0.000000e+00 : f32
    %4 = vector.broadcast %cst_5 : f32 to vector<10x1x8xf32>
    %c0_6 = arith.constant 0 : index
    %c0_7 = arith.constant 0 : index
    %c0_8 = arith.constant 0 : index
    %5 = vector.load %arg7[%c0_6, %c0_7, %c0_8] : memref<10x10x8xf32, #tpu.memory_space<vmem>>, vector<10x1x8xf32>
    tpu.vector_store %arg7[%c0_6, %c0_7, %c0_8], %4 {strides = array<i32>} : memref<10x10x8xf32, #tpu.memory_space<vmem>>, vector<10x1x8xf32>,
    %cst_9 = arith.constant 0.000000e+00 : f32
    %6 = vector.broadcast %cst_9 : f32 to vector<10x1x8xf32>
    %c0_10 = arith.constant 0 : index
    %c9_11 = arith.constant 9 : index
    %c0_12 = arith.constant 0 : index
    %7 = vector.load %arg7[%c0_10, %c9_11, %c0_12] : memref<10x10x8xf32, #tpu.memory_space<vmem>>, vector<10x1x8xf32>
    tpu.vector_store %arg7[%c0_10, %c9_11, %c0_12], %6 {strides = array<i32>} : memref<10x10x8xf32, #tpu.memory_space<vmem>>, vector<10x1x8xf32>,
    %c0_13 = arith.constant 0 : index
    %c0_14 = arith.constant 0 : index
    %c0_15 = arith.constant 0 : index
    %c0_16 = arith.constant 0 : index
    %8 = vector.load %arg1[%c0_13, %c0_14, %c0_15, %c0_16] : memref<1x8x8x8xf32, #tpu.memory_space<vmem>>, vector<1x8x8x8xf32>
    %9 = vector.shape_cast %8 : vector<1x8x8x8xf32> to vector<8x8x8xf32>
    %c1 = arith.constant 1 : index
    %c1_17 = arith.constant 1 : index
    %c0_18 = arith.constant 0 : index
    %10 = vector.load %arg7[%c1, %c1_17, %c0_18] : memref<10x10x8xf32, #tpu.memory_space<vmem>>, vector<8x8x8xf32>
    tpu.vector_store %arg7[%c1, %c1_17, %c0_18], %9 {strides = array<i32>} : memref<10x10x8xf32, #tpu.memory_space<vmem>>, vector<8x8x8xf32>,
    %c0_19 = arith.constant 0 : index
    %c0_20 = arith.constant 0 : index
    %c0_21 = arith.constant 0 : index
    %11 = vector.load %arg7[%c0_19, %c0_20, %c0_21] : memref<10x10x8xf32, #tpu.memory_space<vmem>>, vector<8x8x8xf32>
    %12 = vector.shape_cast %11 : vector<8x8x8xf32> to vector<64x8xf32>
    %c0_22 = arith.constant 0 : index
    %c0_23 = arith.constant 0 : index
    %13 = vector.load %arg9[%c0_22, %c0_23] : memref<64x72xf32, #tpu.memory_space<vmem>>, vector<64x8xf32>
    tpu.vector_store %arg9[%c0_22, %c0_23], %12 {strides = array<i32>} : memref<64x72xf32, #tpu.memory_space<vmem>>, vector<64x8xf32>,
    %c0_24 = arith.constant 0 : index
    %c1_25 = arith.constant 1 : index
    %c0_26 = arith.constant 0 : index
    %14 = vector.load %arg7[%c0_24, %c1_25, %c0_26] : memref<10x10x8xf32, #tpu.memory_space<vmem>>, vector<8x8x8xf32>
    %15 = vector.shape_cast %14 : vector<8x8x8xf32> to vector<64x8xf32>
    %c0_27 = arith.constant 0 : index
    %c8 = arith.constant 8 : index
    %16 = vector.load %arg9[%c0_27, %c8] : memref<64x72xf32, #tpu.memory_space<vmem>>, vector<64x8xf32>
    tpu.vector_store %arg9[%c0_27, %c8], %15 {strides = array<i32>} : memref<64x72xf32, #tpu.memory_space<vmem>>, vector<64x8xf32>,
    %c0_28 = arith.constant 0 : index
    %c2 = arith.constant 2 : index
    %c0_29 = arith.constant 0 : index
    %17 = vector.load %arg7[%c0_28, %c2, %c0_29] : memref<10x10x8xf32, #tpu.memory_space<vmem>>, vector<8x8x8xf32>
    %18 = vector.shape_cast %17 : vector<8x8x8xf32> to vector<64x8xf32>
    %c0_30 = arith.constant 0 : index
    %c16 = arith.constant 16 : index
    %19 = vector.load %arg9[%c0_30, %c16] : memref<64x72xf32, #tpu.memory_space<vmem>>, vector<64x8xf32>
    tpu.vector_store %arg9[%c0_30, %c16], %18 {strides = array<i32>} : memref<64x72xf32, #tpu.memory_space<vmem>>, vector<64x8xf32>,
    %c1_31 = arith.constant 1 : index
    %c0_32 = arith.constant 0 : index
    %c0_33 = arith.constant 0 : index
    %20 = vector.load %arg7[%c1_31, %c0_32, %c0_33] : memref<10x10x8xf32, #tpu.memory_space<vmem>>, vector<8x8x8xf32>
    %21 = vector.shape_cast %20 : vector<8x8x8xf32> to vector<64x8xf32>
    %c0_34 = arith.constant 0 : index
    %c24 = arith.constant 24 : index
    %22 = vector.load %arg9[%c0_34, %c24] : memref<64x72xf32, #tpu.memory_space<vmem>>, vector<64x8xf32>
    tpu.vector_store %arg9[%c0_34, %c24], %21 {strides = array<i32>} : memref<64x72xf32, #tpu.memory_space<vmem>>, vector<64x8xf32>,
    %c1_35 = arith.constant 1 : index
    %c1_36 = arith.constant 1 : index
    %c0_37 = arith.constant 0 : index
    %23 = vector.load %arg7[%c1_35, %c1_36, %c0_37] : memref<10x10x8xf32, #tpu.memory_space<vmem>>, vector<8x8x8xf32>
    %24 = vector.shape_cast %23 : vector<8x8x8xf32> to vector<64x8xf32>
    %c0_38 = arith.constant 0 : index
    %c32 = arith.constant 32 : index
    %25 = vector.load %arg9[%c0_38, %c32] : memref<64x72xf32, #tpu.memory_space<vmem>>, vector<64x8xf32>
    tpu.vector_store %arg9[%c0_38, %c32], %24 {strides = array<i32>} : memref<64x72xf32, #tpu.memory_space<vmem>>, vector<64x8xf32>,
    %c1_39 = arith.constant 1 : index
    %c2_40 = arith.constant 2 : index
    %c0_41 = arith.constant 0 : index
    %26 = vector.load %arg7[%c1_39, %c2_40, %c0_41] : memref<10x10x8xf32, #tpu.memory_space<vmem>>, vector<8x8x8xf32>
    %27 = vector.shape_cast %26 : vector<8x8x8xf32> to vector<64x8xf32>
    %c0_42 = arith.constant 0 : index
    %c40 = arith.constant 40 : index
    %28 = vector.load %arg9[%c0_42, %c40] : memref<64x72xf32, #tpu.memory_space<vmem>>, vector<64x8xf32>
    tpu.vector_store %arg9[%c0_42, %c40], %27 {strides = array<i32>} : memref<64x72xf32, #tpu.memory_space<vmem>>, vector<64x8xf32>,
    %c2_43 = arith.constant 2 : index
    %c0_44 = arith.constant 0 : index
    %c0_45 = arith.constant 0 : index
    %29 = vector.load %arg7[%c2_43, %c0_44, %c0_45] : memref<10x10x8xf32, #tpu.memory_space<vmem>>, vector<8x8x8xf32>
    %30 = vector.shape_cast %29 : vector<8x8x8xf32> to vector<64x8xf32>
    %c0_46 = arith.constant 0 : index
    %c48 = arith.constant 48 : index
    %31 = vector.load %arg9[%c0_46, %c48] : memref<64x72xf32, #tpu.memory_space<vmem>>, vector<64x8xf32>
    tpu.vector_store %arg9[%c0_46, %c48], %30 {strides = array<i32>} : memref<64x72xf32, #tpu.memory_space<vmem>>, vector<64x8xf32>,
    %c2_47 = arith.constant 2 : index
    %c1_48 = arith.constant 1 : index
    %c0_49 = arith.constant 0 : index
    %32 = vector.load %arg7[%c2_47, %c1_48, %c0_49] : memref<10x10x8xf32, #tpu.memory_space<vmem>>, vector<8x8x8xf32>
    %33 = vector.shape_cast %32 : vector<8x8x8xf32> to vector<64x8xf32>
    %c0_50 = arith.constant 0 : index
    %c56 = arith.constant 56 : index
    %34 = vector.load %arg9[%c0_50, %c56] : memref<64x72xf32, #tpu.memory_space<vmem>>, vector<64x8xf32>
    tpu.vector_store %arg9[%c0_50, %c56], %33 {strides = array<i32>} : memref<64x72xf32, #tpu.memory_space<vmem>>, vector<64x8xf32>,
    %c2_51 = arith.constant 2 : index
    %c2_52 = arith.constant 2 : index
    %c0_53 = arith.constant 0 : index
    %35 = vector.load %arg7[%c2_51, %c2_52, %c0_53] : memref<10x10x8xf32, #tpu.memory_space<vmem>>, vector<8x8x8xf32>
    %36 = vector.shape_cast %35 : vector<8x8x8xf32> to vector<64x8xf32>
    %c0_54 = arith.constant 0 : index
    %c64 = arith.constant 64 : index
    %37 = vector.load %arg9[%c0_54, %c64] : memref<64x72xf32, #tpu.memory_space<vmem>>, vector<64x8xf32>
    tpu.vector_store %arg9[%c0_54, %c64], %36 {strides = array<i32>} : memref<64x72xf32, #tpu.memory_space<vmem>>, vector<64x8xf32>,
    %c0_55 = arith.constant 0 : index
    %c0_56 = arith.constant 0 : index
    %38 = vector.load %arg9[%c0_55, %c0_56] : memref<64x72xf32, #tpu.memory_space<vmem>>, vector<64x72xf32>
    %c0_57 = arith.constant 0 : index
    %c0_58 = arith.constant 0 : index
    %39 = vector.load %arg2[%c0_57, %c0_58] : memref<72x32xf32, #tpu.memory_space<vmem>>, vector<72x32xf32>
    %cst_59 = arith.constant dense<0.000000e+00> : vector<64x32xf32>
    %40 = tpu.matmul %38, %39, %cst_59 {dimension_numbers = #tpu.dot_dimension_numbers<[1], [0], [0], [1], [0, 0, 1, 1], [], []>} : vector<64x72xf32>, vector<72x32xf32>, vector<64x32xf32> -> vector<64x32xf32>
    %c0_60 = arith.constant 0 : index
    %c0_61 = arith.constant 0 : index
    %41 = vector.load %arg3[%c0_60, %c0_61] : memref<1x32xf32, #tpu.memory_space<vmem>>, vector<1x32xf32>
    %42 = vector.shape_cast %41 : vector<1x32xf32> to vector<32xf32>
    %43 = vector.shape_cast %42 : vector<32xf32> to vector<1x32xf32>
    %44 = vector.broadcast %43 : vector<1x32xf32> to vector<64x32xf32>
    %45 = arith.addf %40, %44 : vector<64x32xf32>
    %cst_62 = arith.constant 0.000000e+00 : f32
    %46 = vector.broadcast %cst_62 : f32 to vector<64x32xf32>
    %47 = arith.maximumf %45, %46 : vector<64x32xf32>
    %cst_63 = arith.constant 0.000000e+00 : f32
    %48 = vector.broadcast %cst_63 : f32 to vector<1x10x32xf32>
    %c0_64 = arith.constant 0 : index
    %c0_65 = arith.constant 0 : index
    %c0_66 = arith.constant 0 : index
    %49 = vector.load %arg8[%c0_64, %c0_65, %c0_66] : memref<10x10x32xf32, #tpu.memory_space<vmem>>, vector<1x10x32xf32>
    tpu.vector_store %arg8[%c0_64, %c0_65, %c0_66], %48 {strides = array<i32>} : memref<10x10x32xf32, #tpu.memory_space<vmem>>, vector<1x10x32xf32>,
    %cst_67 = arith.constant 0.000000e+00 : f32
    %50 = vector.broadcast %cst_67 : f32 to vector<1x10x32xf32>
    %c9_68 = arith.constant 9 : index
    %c0_69 = arith.constant 0 : index
    %c0_70 = arith.constant 0 : index
    %51 = vector.load %arg8[%c9_68, %c0_69, %c0_70] : memref<10x10x32xf32, #tpu.memory_space<vmem>>, vector<1x10x32xf32>
    tpu.vector_store %arg8[%c9_68, %c0_69, %c0_70], %50 {strides = array<i32>} : memref<10x10x32xf32, #tpu.memory_space<vmem>>, vector<1x10x32xf32>,
    %cst_71 = arith.constant 0.000000e+00 : f32
    %52 = vector.broadcast %cst_71 : f32 to vector<10x1x32xf32>
    %c0_72 = arith.constant 0 : index
    %c0_73 = arith.constant 0 : index
    %c0_74 = arith.constant 0 : index
    %53 = vector.load %arg8[%c0_72, %c0_73, %c0_74] : memref<10x10x32xf32, #tpu.memory_space<vmem>>, vector<10x1x32xf32>
    tpu.vector_store %arg8[%c0_72, %c0_73, %c0_74], %52 {strides = array<i32>} : memref<10x10x32xf32, #tpu.memory_space<vmem>>, vector<10x1x32xf32>,
    %cst_75 = arith.constant 0.000000e+00 : f32
    %54 = vector.broadcast %cst_75 : f32 to vector<10x1x32xf32>
    %c0_76 = arith.constant 0 : index
    %c9_77 = arith.constant 9 : index
    %c0_78 = arith.constant 0 : index
    %55 = vector.load %arg8[%c0_76, %c9_77, %c0_78] : memref<10x10x32xf32, #tpu.memory_space<vmem>>, vector<10x1x32xf32>
    tpu.vector_store %arg8[%c0_76, %c9_77, %c0_78], %54 {strides = array<i32>} : memref<10x10x32xf32, #tpu.memory_space<vmem>>, vector<10x1x32xf32>,
    %56 = vector.shape_cast %47 : vector<64x32xf32> to vector<8x8x32xf32>
    %c1_79 = arith.constant 1 : index
    %c1_80 = arith.constant 1 : index
    %c0_81 = arith.constant 0 : index
    %57 = vector.load %arg8[%c1_79, %c1_80, %c0_81] : memref<10x10x32xf32, #tpu.memory_space<vmem>>, vector<8x8x32xf32>
    tpu.vector_store %arg8[%c1_79, %c1_80, %c0_81], %56 {strides = array<i32>} : memref<10x10x32xf32, #tpu.memory_space<vmem>>, vector<8x8x32xf32>,
    %c0_82 = arith.constant 0 : index
    %c0_83 = arith.constant 0 : index
    %c0_84 = arith.constant 0 : index
    %58 = vector.load %arg8[%c0_82, %c0_83, %c0_84] : memref<10x10x32xf32, #tpu.memory_space<vmem>>, vector<8x8x32xf32>
    %59 = vector.shape_cast %58 : vector<8x8x32xf32> to vector<64x32xf32>
    %c0_85 = arith.constant 0 : index
    %c0_86 = arith.constant 0 : index
    %60 = vector.load %arg10[%c0_85, %c0_86] : memref<64x288xf32, #tpu.memory_space<vmem>>, vector<64x32xf32>
    tpu.vector_store %arg10[%c0_85, %c0_86], %59 {strides = array<i32>} : memref<64x288xf32, #tpu.memory_space<vmem>>, vector<64x32xf32>,
    %c0_87 = arith.constant 0 : index
    %c1_88 = arith.constant 1 : index
    %c0_89 = arith.constant 0 : index
    %61 = vector.load %arg8[%c0_87, %c1_88, %c0_89] : memref<10x10x32xf32, #tpu.memory_space<vmem>>, vector<8x8x32xf32>
    %62 = vector.shape_cast %61 : vector<8x8x32xf32> to vector<64x32xf32>
    %c0_90 = arith.constant 0 : index
    %c32_91 = arith.constant 32 : index
    %63 = vector.load %arg10[%c0_90, %c32_91] : memref<64x288xf32, #tpu.memory_space<vmem>>, vector<64x32xf32>
    tpu.vector_store %arg10[%c0_90, %c32_91], %62 {strides = array<i32>} : memref<64x288xf32, #tpu.memory_space<vmem>>, vector<64x32xf32>,
    %c0_92 = arith.constant 0 : index
    %c2_93 = arith.constant 2 : index
    %c0_94 = arith.constant 0 : index
    %64 = vector.load %arg8[%c0_92, %c2_93, %c0_94] : memref<10x10x32xf32, #tpu.memory_space<vmem>>, vector<8x8x32xf32>
    %65 = vector.shape_cast %64 : vector<8x8x32xf32> to vector<64x32xf32>
    %c0_95 = arith.constant 0 : index
    %c64_96 = arith.constant 64 : index
    %66 = vector.load %arg10[%c0_95, %c64_96] : memref<64x288xf32, #tpu.memory_space<vmem>>, vector<64x32xf32>
    tpu.vector_store %arg10[%c0_95, %c64_96], %65 {strides = array<i32>} : memref<64x288xf32, #tpu.memory_space<vmem>>, vector<64x32xf32>,
    %c1_97 = arith.constant 1 : index
    %c0_98 = arith.constant 0 : index
    %c0_99 = arith.constant 0 : index
    %67 = vector.load %arg8[%c1_97, %c0_98, %c0_99] : memref<10x10x32xf32, #tpu.memory_space<vmem>>, vector<8x8x32xf32>
    %68 = vector.shape_cast %67 : vector<8x8x32xf32> to vector<64x32xf32>
    %c0_100 = arith.constant 0 : index
    %c96 = arith.constant 96 : index
    %69 = vector.load %arg10[%c0_100, %c96] : memref<64x288xf32, #tpu.memory_space<vmem>>, vector<64x32xf32>
    tpu.vector_store %arg10[%c0_100, %c96], %68 {strides = array<i32>} : memref<64x288xf32, #tpu.memory_space<vmem>>, vector<64x32xf32>,
    %c1_101 = arith.constant 1 : index
    %c1_102 = arith.constant 1 : index
    %c0_103 = arith.constant 0 : index
    %70 = vector.load %arg8[%c1_101, %c1_102, %c0_103] : memref<10x10x32xf32, #tpu.memory_space<vmem>>, vector<8x8x32xf32>
    %71 = vector.shape_cast %70 : vector<8x8x32xf32> to vector<64x32xf32>
    %c0_104 = arith.constant 0 : index
    %c128 = arith.constant 128 : index
    %72 = vector.load %arg10[%c0_104, %c128] : memref<64x288xf32, #tpu.memory_space<vmem>>, vector<64x32xf32>
    tpu.vector_store %arg10[%c0_104, %c128], %71 {strides = array<i32>} : memref<64x288xf32, #tpu.memory_space<vmem>>, vector<64x32xf32>,
    %c1_105 = arith.constant 1 : index
    %c2_106 = arith.constant 2 : index
    %c0_107 = arith.constant 0 : index
    %73 = vector.load %arg8[%c1_105, %c2_106, %c0_107] : memref<10x10x32xf32, #tpu.memory_space<vmem>>, vector<8x8x32xf32>
    %74 = vector.shape_cast %73 : vector<8x8x32xf32> to vector<64x32xf32>
    %c0_108 = arith.constant 0 : index
    %c160 = arith.constant 160 : index
    %75 = vector.load %arg10[%c0_108, %c160] : memref<64x288xf32, #tpu.memory_space<vmem>>, vector<64x32xf32>
    tpu.vector_store %arg10[%c0_108, %c160], %74 {strides = array<i32>} : memref<64x288xf32, #tpu.memory_space<vmem>>, vector<64x32xf32>,
    %c2_109 = arith.constant 2 : index
    %c0_110 = arith.constant 0 : index
    %c0_111 = arith.constant 0 : index
    %76 = vector.load %arg8[%c2_109, %c0_110, %c0_111] : memref<10x10x32xf32, #tpu.memory_space<vmem>>, vector<8x8x32xf32>
    %77 = vector.shape_cast %76 : vector<8x8x32xf32> to vector<64x32xf32>
    %c0_112 = arith.constant 0 : index
    %c192 = arith.constant 192 : index
    %78 = vector.load %arg10[%c0_112, %c192] : memref<64x288xf32, #tpu.memory_space<vmem>>, vector<64x32xf32>
    tpu.vector_store %arg10[%c0_112, %c192], %77 {strides = array<i32>} : memref<64x288xf32, #tpu.memory_space<vmem>>, vector<64x32xf32>,
    %c2_113 = arith.constant 2 : index
    %c1_114 = arith.constant 1 : index
    %c0_115 = arith.constant 0 : index
    %79 = vector.load %arg8[%c2_113, %c1_114, %c0_115] : memref<10x10x32xf32, #tpu.memory_space<vmem>>, vector<8x8x32xf32>
    %80 = vector.shape_cast %79 : vector<8x8x32xf32> to vector<64x32xf32>
    %c0_116 = arith.constant 0 : index
    %c224 = arith.constant 224 : index
    %81 = vector.load %arg10[%c0_116, %c224] : memref<64x288xf32, #tpu.memory_space<vmem>>, vector<64x32xf32>
    tpu.vector_store %arg10[%c0_116, %c224], %80 {strides = array<i32>} : memref<64x288xf32, #tpu.memory_space<vmem>>, vector<64x32xf32>,
    %c2_117 = arith.constant 2 : index
    %c2_118 = arith.constant 2 : index
    %c0_119 = arith.constant 0 : index
    %82 = vector.load %arg8[%c2_117, %c2_118, %c0_119] : memref<10x10x32xf32, #tpu.memory_space<vmem>>, vector<8x8x32xf32>
    %83 = vector.shape_cast %82 : vector<8x8x32xf32> to vector<64x32xf32>
    %c0_120 = arith.constant 0 : index
    %c256 = arith.constant 256 : index
    %84 = vector.load %arg10[%c0_120, %c256] : memref<64x288xf32, #tpu.memory_space<vmem>>, vector<64x32xf32>
    tpu.vector_store %arg10[%c0_120, %c256], %83 {strides = array<i32>} : memref<64x288xf32, #tpu.memory_space<vmem>>, vector<64x32xf32>,
    %c0_121 = arith.constant 0 : index
    %c0_122 = arith.constant 0 : index
    %85 = vector.load %arg10[%c0_121, %c0_122] : memref<64x288xf32, #tpu.memory_space<vmem>>, vector<64x288xf32>
    %c0_123 = arith.constant 0 : index
    %c0_124 = arith.constant 0 : index
    %86 = vector.load %arg4[%c0_123, %c0_124] : memref<288x32xf32, #tpu.memory_space<vmem>>, vector<288x32xf32>
    %cst_125 = arith.constant dense<0.000000e+00> : vector<64x32xf32>
    %87 = tpu.matmul %85, %86, %cst_125 {dimension_numbers = #tpu.dot_dimension_numbers<[1], [0], [0], [1], [0, 0, 1, 1], [], []>} : vector<64x288xf32>, vector<288x32xf32>, vector<64x32xf32> -> vector<64x32xf32>
    %c0_126 = arith.constant 0 : index
    %c0_127 = arith.constant 0 : index
    %88 = vector.load %arg5[%c0_126, %c0_127] : memref<1x32xf32, #tpu.memory_space<vmem>>, vector<1x32xf32>
    %89 = vector.shape_cast %88 : vector<1x32xf32> to vector<32xf32>
    %90 = vector.shape_cast %89 : vector<32xf32> to vector<1x32xf32>
    %91 = vector.broadcast %90 : vector<1x32xf32> to vector<64x32xf32>
    %92 = arith.addf %87, %91 : vector<64x32xf32>
    %cst_128 = arith.constant 0.000000e+00 : f32
    %93 = vector.broadcast %cst_128 : f32 to vector<64x32xf32>
    %94 = arith.maximumf %92, %93 : vector<64x32xf32>
    %c0_129 = arith.constant 0 : index
    %c0_130 = arith.constant 0 : index
    %c0_131 = arith.constant 0 : index
    %95 = vector.load %arg6[%c0_129, %c0_130, %c0_131] : memref<1x64x32xf32, #tpu.memory_space<vmem>>, vector<1x64x32xf32>
    %96 = vector.shape_cast %95 : vector<1x64x32xf32> to vector<64x32xf32>
    %97 = vector.shape_cast %94 : vector<64x32xf32> to vector<1x64x32xf32>
    tpu.vector_store %arg6[%c0_129, %c0_130, %c0_131], %97 {strides = array<i32>} : memref<1x64x32xf32, #tpu.memory_space<vmem>>, vector<1x64x32xf32>,
    return
  }
  func.func @transform_0(%arg0: i32) -> (i32, i32, i32, i32) {
    %c0_i32 = arith.constant 0 : i32
    %c0_i32_0 = arith.constant 0 : i32
    %c0_i32_1 = arith.constant 0 : i32
    %c0_i32_2 = arith.constant 0 : i32
    return %arg0, %c0_i32, %c0_i32_0, %c0_i32_1 : i32, i32, i32, i32
  }
  func.func @transform_1(%arg0: i32) -> (i32, i32) {
    %c0_i32 = arith.constant 0 : i32
    %c0_i32_0 = arith.constant 0 : i32
    %c0_i32_1 = arith.constant 0 : i32
    return %c0_i32, %c0_i32_0 : i32, i32
  }
  func.func @transform_2(%arg0: i32) -> (i32, i32) {
    %c0_i32 = arith.constant 0 : i32
    %c0_i32_0 = arith.constant 0 : i32
    %c0_i32_1 = arith.constant 0 : i32
    return %c0_i32, %c0_i32_0 : i32, i32
  }
  func.func @transform_3(%arg0: i32) -> (i32, i32) {
    %c0_i32 = arith.constant 0 : i32
    %c0_i32_0 = arith.constant 0 : i32
    %c0_i32_1 = arith.constant 0 : i32
    return %c0_i32, %c0_i32_0 : i32, i32
  }
  func.func @transform_4(%arg0: i32) -> (i32, i32) {
    %c0_i32 = arith.constant 0 : i32
    %c0_i32_0 = arith.constant 0 : i32
    %c0_i32_1 = arith.constant 0 : i32
    return %c0_i32, %c0_i32_0 : i32, i32
  }
  func.func @transform_5(%arg0: i32) -> (i32, i32, i32) {
    %c0_i32 = arith.constant 0 : i32
    %c0_i32_0 = arith.constant 0 : i32
    %c0_i32_1 = arith.constant 0 : i32
    return %arg0, %c0_i32, %c0_i32_0 : i32, i32, i32
  }
}

</mosaic_0001>

<llo_original>
// kernel: tpu_custom_call.1
$region0: #{tpu_custom_call.1}
  #allocation0 [shape = 'u32[]', space=smem, size = 0x4, offset = 0x4, fixed_abs, tag = 'smem constant byte address 0x4 - core index']
  #allocation1 [shape = 'u32[72,128]{1,0:T(1,128)}', space=vmem, size = 0x9000, scoped, tag = 'internal scratch']
  #allocation2 [shape = 'f32[10,10,8]{2,1,0:T(8,128)}', space=vmem, size = 0x14000, scoped, tag = 'scratch operand']
  #allocation3 [shape = 'f32[10,10,32]{2,1,0:T(8,128)}', space=vmem, size = 0x14000, scoped, tag = 'scratch operand']
  #allocation4 [shape = 'f32[64,72]{1,0:T(8,128)}', space=vmem, size = 0x8000, scoped, tag = 'scratch operand']
  #allocation5 [shape = 'f32[64,288]{1,0:T(8,128)}', space=vmem, size = 0x18000, scoped, tag = 'scratch operand']
  %s0 = inlined_call_operand.vmem [shape: f32[2,8,8,8], index: 0, kind: input, shape index: {}]
  %s1 = inlined_call_operand.vmem [shape: f32[72,32], index: 1, kind: input, shape index: {}]
  %s2 = inlined_call_operand.vmem [shape: f32[1,32], index: 2, kind: input, shape index: {}]
  %s3 = inlined_call_operand.vmem [shape: f32[288,32], index: 3, kind: input, shape index: {}]
  %s4 = inlined_call_operand.vmem [shape: f32[1,32], index: 4, kind: input, shape index: {}]
  %s5 = inlined_call_operand.vmem [shape: f32[2,64,32], index: 5, kind: output, shape index: {}]
  %s6 = sld [smem:[#allocation0]]
  $region53: #{tpu_custom_call.1} parent=0
    _
  %s8 = ssub.s32 1, %s6
  %s9 = scalar_select 0, %s8, %s6
  loop: start=0, step=1, limit=4
  $region2: #{tpu_custom_call.1} parent=0 // loop_pre_header
    _
  $region3: #{tpu_custom_call.1} parent=0 // loop_header
    %s11 = sphi 0, %s15
    %p12 = scmp.ge.s32.totalorder %s11, 4
    %s21 = sphi 0, %s23
    %s24 = sphi 0, %s21
    %s25 = sphi 0, %s24
    %s41 = sphi 0, %s25
    %s45 = sphi 0, %s45
    %s47 = sphi 0, %s45
    %s48 = sphi 0, %s47
    %s62 = sphi 0, %s48
    %s66 = sphi 0, %s66
    %s68 = sphi 0, %s66
    %s69 = sphi 0, %s68
    %s83 = sphi 0, %s69
    %s87 = sphi 0, %s87
    %s89 = sphi 0, %s87
    %s90 = sphi 0, %s89
    %s104 = sphi 0, %s90
    %s108 = sphi 0, %s108
    %s110 = sphi 0, %s108
    %s111 = sphi 0, %s110
    %s125 = sphi 0, %s111
    %s131 = sphi 0, %s133
    %s134 = sphi 0, %s131
    %s135 = sphi 0, %s134
    %s151 = sphi 0, %s135
  $region4: #{tpu_custom_call.1} parent=0 // loop_header_branch
    %14 = sbr.rel (%p12) target = $region8
  $region5: #{tpu_custom_call.1} parent=0 // loop_body
    %s16 = ssub.s32 %s11, 1
    %s17 = ssub.s32 %s11, 2
    %s18 = sadd.s32 %s11, 1
    %s19 = ssub.s32 %s11, %s18
    %p20 = scmp.eq.s32.totalorder %s19, 0
    %s22 = sadd.s32 %s21, 1
    %s23 = scalar_select %p20, %s21, %s22
    %p26 = pneg %p20
    %p27 = scmp.eq.s32.totalorder %s11, 1
    %p28 = por %p26, %p27
    %p29 = scmp.ne.s32.totalorder %s21, %s24
    %p30 = scmp.eq.s32.totalorder %s11, 0
    %p31 = por %p29, %p30
    %p32 = scmp.ne.s32.totalorder %s21, %s24
    %p33 = scmp.eq.s32.totalorder %s16, 1
    %p34 = por %p32, %p33
    %p35 = scmp.ne.s32.totalorder %s24, %s25
    %p36 = scmp.eq.s32.totalorder %s16, 0
    %p37 = por %p35, %p36
    %p38 = scmp.ne.s32.totalorder %s24, %s25
    %p39 = scmp.eq.s32.totalorder %s17, 1
    %p40 = por %p38, %p39
    %p42 = scmp.ne.s32.totalorder %s25, %s41
    %p43 = scmp.eq.s32.totalorder %s17, 0
    %p44 = por %p42, %p43
    %s46 = sadd.s32 %s45, 1
    %p49 = scmp.eq.s32.totalorder %s11, 1
    %p50 = scmp.ne.s32.totalorder %s45, %s47
    %p51 = scmp.eq.s32.totalorder %s11, 0
    %p52 = por %p50, %p51
    %p53 = scmp.ne.s32.totalorder %s45, %s47
    %p54 = scmp.eq.s32.totalorder %s16, 1
    %p55 = por %p53, %p54
    %p56 = scmp.ne.s32.totalorder %s47, %s48
    %p57 = scmp.eq.s32.totalorder %s16, 0
    %p58 = por %p56, %p57
    %p59 = scmp.ne.s32.totalorder %s47, %s48
    %p60 = scmp.eq.s32.totalorder %s17, 1
    %p61 = por %p59, %p60
    %p63 = scmp.ne.s32.totalorder %s48, %s62
    %p64 = scmp.eq.s32.totalorder %s17, 0
    %p65 = por %p63, %p64
    %s67 = sadd.s32 %s66, 1
    %p70 = scmp.eq.s32.totalorder %s11, 1
    %p71 = scmp.ne.s32.totalorder %s66, %s68
    %p72 = scmp.eq.s32.totalorder %s11, 0
    %p73 = por %p71, %p72
    %p74 = scmp.ne.s32.totalorder %s66, %s68
    %p75 = scmp.eq.s32.totalorder %s16, 1
    %p76 = por %p74, %p75
    %p77 = scmp.ne.s32.totalorder %s68, %s69
    %p78 = scmp.eq.s32.totalorder %s16, 0
    %p79 = por %p77, %p78
    %p80 = scmp.ne.s32.totalorder %s68, %s69
    %p81 = scmp.eq.s32.totalorder %s17, 1
    %p82 = por %p80, %p81
    %p84 = scmp.ne.s32.totalorder %s69, %s83
    %p85 = scmp.eq.s32.totalorder %s17, 0
    %p86 = por %p84, %p85
    %s88 = sadd.s32 %s87, 1
    %p91 = scmp.eq.s32.totalorder %s11, 1
    %p92 = scmp.ne.s32.totalorder %s87, %s89
    %p93 = scmp.eq.s32.totalorder %s11, 0
    %p94 = por %p92, %p93
    %p95 = scmp.ne.s32.totalorder %s87, %s89
    %p96 = scmp.eq.s32.totalorder %s16, 1
    %p97 = por %p95, %p96
    %p98 = scmp.ne.s32.totalorder %s89, %s90
    %p99 = scmp.eq.s32.totalorder %s16, 0
    %p100 = por %p98, %p99
    %p101 = scmp.ne.s32.totalorder %s89, %s90
    %p102 = scmp.eq.s32.totalorder %s17, 1
    %p103 = por %p101, %p102
    %p105 = scmp.ne.s32.totalorder %s90, %s104
    %p106 = scmp.eq.s32.totalorder %s17, 0
    %p107 = por %p105, %p106
    %s109 = sadd.s32 %s108, 1
    %p112 = scmp.eq.s32.totalorder %s11, 1
    %p113 = scmp.ne.s32.totalorder %s108, %s110
    %p114 = scmp.eq.s32.totalorder %s11, 0
    %p115 = por %p113, %p114
    %p116 = scmp.ne.s32.totalorder %s108, %s110
    %p117 = scmp.eq.s32.totalorder %s16, 1
    %p118 = por %p116, %p117
    %p119 = scmp.ne.s32.totalorder %s110, %s111
    %p120 = scmp.eq.s32.totalorder %s16, 0
    %p121 = por %p119, %p120
    %p122 = scmp.ne.s32.totalorder %s110, %s111
    %p123 = scmp.eq.s32.totalorder %s17, 1
    %p124 = por %p122, %p123
    %p126 = scmp.ne.s32.totalorder %s111, %s125
    %p127 = scmp.eq.s32.totalorder %s17, 0
    %p128 = por %p126, %p127
    %s129 = ssub.s32 %s11, %s18
    %p130 = scmp.eq.s32.totalorder %s129, 0
    %s132 = sadd.s32 %s131, 1
    %s133 = scalar_select %p130, %s131, %s132
    %p136 = pneg %p130
    %p137 = scmp.eq.s32.totalorder %s11, 1
    %p138 = por %p136, %p137
    %p139 = scmp.ne.s32.totalorder %s131, %s134
    %p140 = scmp.eq.s32.totalorder %s11, 0
    %p141 = por %p139, %p140
    %p142 = scmp.ne.s32.totalorder %s131, %s134
    %p143 = scmp.eq.s32.totalorder %s16, 1
    %p144 = por %p142, %p143
    %p145 = scmp.ne.s32.totalorder %s134, %s135
    %p146 = scmp.eq.s32.totalorder %s16, 0
    %p147 = por %p145, %p146
    %p148 = scmp.ne.s32.totalorder %s134, %s135
    %p149 = scmp.eq.s32.totalorder %s17, 1
    %p150 = por %p148, %p149
    %p152 = scmp.ne.s32.totalorder %s135, %s151
    %p153 = scmp.eq.s32.totalorder %s17, 0
    %p154 = por %p152, %p153
    %p155 = scmp.le.s32.totalorder 1, %s11
    %p156 = scmp.lt.s32.totalorder %s11, 3
    %p157 = pnand %p155, %p156
    %p158 = pneg %p157
    // Predicated region
    $region9: #{tpu_custom_call.1} parent=5 // pred_check
      _
    $region10: #{tpu_custom_call.1} parent=5 // pred_check_branch
      %160 = sbr.rel (%p157) target = $region12
    $region11: #{tpu_custom_call.1} parent=5 // pred_region
      %s161 = ssub.s32 %s11, 1
      // Predicated region
      $region13: #{tpu_custom_call.1} parent=11 // pred_check
        %p162 = pneg %p58
      $region14: #{tpu_custom_call.1} parent=11 // pred_check_branch
        %164 = sbr.rel (%p162) target = $region16
      $region15: #{tpu_custom_call.1} parent=11 // pred_region
        _
      $region16: #{tpu_custom_call.1} parent=11 // pred_fallthru
        _
      // Predicated region
      $region17: #{tpu_custom_call.1} parent=11 // pred_check
        %p165 = pneg %p79
      $region18: #{tpu_custom_call.1} parent=11 // pred_check_branch
        %167 = sbr.rel (%p165) target = $region20
      $region19: #{tpu_custom_call.1} parent=11 // pred_region
        _
      $region20: #{tpu_custom_call.1} parent=11 // pred_fallthru
        _
      // Predicated region
      $region21: #{tpu_custom_call.1} parent=11 // pred_check
        %p168 = pneg %p100
      $region22: #{tpu_custom_call.1} parent=11 // pred_check_branch
        %170 = sbr.rel (%p168) target = $region24
      $region23: #{tpu_custom_call.1} parent=11 // pred_region
        _
      $region24: #{tpu_custom_call.1} parent=11 // pred_fallthru
        _
      // Predicated region
      $region25: #{tpu_custom_call.1} parent=11 // pred_check
        %p171 = pneg %p121
      $region26: #{tpu_custom_call.1} parent=11 // pred_check_branch
        %173 = sbr.rel (%p171) target = $region28
      $region27: #{tpu_custom_call.1} parent=11 // pred_region
        _
      $region28: #{tpu_custom_call.1} parent=11 // pred_fallthru
        _
    $region12: #{tpu_custom_call.1} parent=5 // pred_fallthru
      _
    %p174 = scmp.lt.s32.totalorder %s11, 2
    // Predicated region
    $region29: #{tpu_custom_call.1} parent=5 // pred_check
      %p175 = pneg %p174
    $region30: #{tpu_custom_call.1} parent=5 // pred_check_branch
      %177 = sbr.rel (%p175) target = $region32
    $region31: #{tpu_custom_call.1} parent=5 // pred_region
      // Predicated region
      $region33: #{tpu_custom_call.1} parent=31 // pred_check
        %p178 = pneg %p31
      $region34: #{tpu_custom_call.1} parent=31 // pred_check_branch
        %180 = sbr.rel (%p178) target = $region36
      $region35: #{tpu_custom_call.1} parent=31 // pred_region
        %p181 = scmp.lt.s32.totalorder %s11, 1
        %s182 = scalar_select %p181, %s11, 1
        %s183 = smul.addr %s182, 8
        %s184 = smul.addr %s183, 8
        %s185 = scalar_lea.vmem %s0, %s184
      $region36: #{tpu_custom_call.1} parent=31 // pred_fallthru
        _
    $region32: #{tpu_custom_call.1} parent=5 // pred_fallthru
      _
    %p186 = scmp.le.s32.totalorder 1, %s11
    %p187 = scmp.lt.s32.totalorder %s11, 3
    %p188 = pnand %p186, %p187
    %p189 = pneg %p188
    // Predicated region
    $region37: #{tpu_custom_call.1} parent=5 // pred_check
      _
    $region38: #{tpu_custom_call.1} parent=5 // pred_check_branch
      %191 = sbr.rel (%p188) target = $region40
    $region39: #{tpu_custom_call.1} parent=5 // pred_region
      %s192 = ssub.s32 %s11, 1
      %p193 = scmp.lt.s32.totalorder %s16, 1
      %s194 = scalar_select %p193, %s16, 1
      %s195 = smul.addr %s194, 8
      %s196 = smul.addr %s195, 8
      %s197 = scalar_lea.vmem %s0, %s196
      %p198 = pneg %p37
      %p199 = pneg %p34
      %p200 = pneg %p58
      %p201 = pneg %p55
      %p202 = pneg %p79
      %p203 = pneg %p76
      %p204 = pneg %p100
      %p205 = pneg %p97
      %p206 = pneg %p121
      %p207 = pneg %p118
      %p208 = pneg %p147
      %p209 = pneg %p144
      %p210 = scmp.lt.s32.totalorder %s16, 1
      %s211 = scalar_select %p210, %s16, 1
      %s212 = smul.addr %s211, 8
      %s213 = smul.addr %s212, 8
      %s214 = scalar_lea.vmem %s5, %s213
      %p215 = scmp.lt.s32.totalorder %s16, 1
      %s216 = scalar_select %p215, %s16, 1
      %s217 = smul.addr %s216, 8
      %s218 = smul.addr %s217, 8
      %s219 = scalar_lea.vmem %s0, %s218
      %p220 = scmp.lt.s32.totalorder %s16, 1
      %s221 = scalar_select %p220, %s16, 1
      %s222 = smul.addr %s221, 8
      %s223 = smul.addr %s222, 8
      %s224 = scalar_lea.vmem %s5, %s223
      %vm225 = vcmask 64512
      %226 = vst.msk [vmem:[#allocation2] sm:$0xff] %vm225, 0.0
      %vm227 = vcmask 58368
      %228 = vst.msk [vmem:[#allocation2 + $0x8] sm:$0x3] %vm227, 0.0
      %s229 = scalar_lea.vmem [#allocation2], 144
      %230 = vst.msk [vmem:[%s229] sm:$0xff] %vm225, 0.0
      %231 = vst.msk [vmem:[%s229 + $0x8] sm:$0x3] %vm227, 0.0
      %vm232 = vcmask 57344
      %233 = vst.msk [vmem:[#allocation2] sm:$0x1] %vm232, 0.0
      %234 = vst.msk [vmem:[#allocation2 + $0x10] sm:$0x1] %vm232, 0.0
      %235 = vst.msk [vmem:[#allocation2 + $0x20] sm:$0x1] %vm232, 0.0
      %236 = vst.msk [vmem:[#allocation2 + $0x30] sm:$0x1] %vm232, 0.0
      %237 = vst.msk [vmem:[#allocation2 + $0x40] sm:$0x1] %vm232, 0.0
      %238 = vst.msk [vmem:[#allocation2 + $0x50] sm:$0x1] %vm232, 0.0
      %239 = vst.msk [vmem:[#allocation2 + $0x60] sm:$0x1] %vm232, 0.0
      %240 = vst.msk [vmem:[#allocation2 + $0x70] sm:$0x1] %vm232, 0.0
      %241 = vst.msk [vmem:[#allocation2 + $0x80] sm:$0x1] %vm232, 0.0
      %242 = vst.msk [vmem:[#allocation2 + $0x90] sm:$0x1] %vm232, 0.0
      %243 = vst.msk [vmem:[#allocation2 + $0x9] sm:$0x1] %vm232, 0.0
      %244 = vst.msk [vmem:[#allocation2 + $0x19] sm:$0x1] %vm232, 0.0
      %245 = vst.msk [vmem:[#allocation2 + $0x29] sm:$0x1] %vm232, 0.0
      %246 = vst.msk [vmem:[#allocation2 + $0x39] sm:$0x1] %vm232, 0.0
      %247 = vst.msk [vmem:[#allocation2 + $0x49] sm:$0x1] %vm232, 0.0
      %248 = vst.msk [vmem:[#allocation2 + $0x59] sm:$0x1] %vm232, 0.0
      %249 = vst.msk [vmem:[#allocation2 + $0x69] sm:$0x1] %vm232, 0.0
      %250 = vst.msk [vmem:[#allocation2 + $0x79] sm:$0x1] %vm232, 0.0
      %251 = vst.msk [vmem:[#allocation2 + $0x89] sm:$0x1] %vm232, 0.0
      %252 = vst.msk [vmem:[#allocation2 + $0x99] sm:$0x1] %vm232, 0.0
      %v253 = vld [vmem:[%s219] sm:$0xff]
      %v254 = vld [vmem:[%s219 + $0x8] sm:$0xff]
      %v255 = vld [vmem:[%s219 + $0x10] sm:$0xff]
      %v256 = vld [vmem:[%s219 + $0x18] sm:$0xff]
      %v257 = vld [vmem:[%s219 + $0x20] sm:$0xff]
      %v258 = vld [vmem:[%s219 + $0x28] sm:$0xff]
      %v259 = vld [vmem:[%s219 + $0x30] sm:$0xff]
      %v260 = vld [vmem:[%s219 + $0x38] sm:$0xff]
      %s261 = scalar_lea.vmem [#allocation2], 16
      %262 = vst.msk [vmem:[%s261 + $0x1] sm:$0xff] %vm225, %v253
      %263 = vst.msk [vmem:[%s261 + $0x11] sm:$0xff] %vm225, %v254
      %264 = vst.msk [vmem:[%s261 + $0x21] sm:$0xff] %vm225, %v255
      %265 = vst.msk [vmem:[%s261 + $0x31] sm:$0xff] %vm225, %v256
      %266 = vst.msk [vmem:[%s261 + $0x41] sm:$0xff] %vm225, %v257
      %267 = vst.msk [vmem:[%s261 + $0x51] sm:$0xff] %vm225, %v258
      %268 = vst.msk [vmem:[%s261 + $0x61] sm:$0xff] %vm225, %v259
      %269 = vst.msk [vmem:[%s261 + $0x71] sm:$0xff] %vm225, %v260
      %v270 = vld [vmem:[#allocation2] sm:$0xff]
      %v271 = vld [vmem:[#allocation2 + $0x10] sm:$0xff]
      %v272 = vld [vmem:[#allocation2 + $0x20] sm:$0xff]
      %v273 = vld [vmem:[#allocation2 + $0x30] sm:$0xff]
      %v274 = vld [vmem:[#allocation2 + $0x40] sm:$0xff]
      %v275 = vld [vmem:[#allocation2 + $0x50] sm:$0xff]
      %v276 = vld [vmem:[#allocation2 + $0x60] sm:$0xff]
      %v277 = vld [vmem:[#allocation2 + $0x70] sm:$0xff]
      %278 = vst.msk [vmem:[#allocation4] sm:$0xff] %vm225, %v270
      %279 = vst.msk [vmem:[#allocation4 + $0x8] sm:$0xff] %vm225, %v271
      %280 = vst.msk [vmem:[#allocation4 + $0x10] sm:$0xff] %vm225, %v272
      %281 = vst.msk [vmem:[#allocation4 + $0x18] sm:$0xff] %vm225, %v273
      %282 = vst.msk [vmem:[#allocation4 + $0x20] sm:$0xff] %vm225, %v274
      %283 = vst.msk [vmem:[#allocation4 + $0x28] sm:$0xff] %vm225, %v275
      %284 = vst.msk [vmem:[#allocation4 + $0x30] sm:$0xff] %vm225, %v276
      %285 = vst.msk [vmem:[#allocation4 + $0x38] sm:$0xff] %vm225, %v277
      %v286 = vld [vmem:[#allocation2 + $0x1] sm:$0xff]
      %v287 = vld [vmem:[#allocation2 + $0x11] sm:$0xff]
      %v288 = vld [vmem:[#allocation2 + $0x21] sm:$0xff]
      %v289 = vld [vmem:[#allocation2 + $0x31] sm:$0xff]
      %v290 = vld [vmem:[#allocation2 + $0x41] sm:$0xff]
      %v291 = vld [vmem:[#allocation2 + $0x51] sm:$0xff]
      %v292 = vld [vmem:[#allocation2 + $0x61] sm:$0xff]
      %v293 = vld [vmem:[#allocation2 + $0x71] sm:$0xff]
      %302 = vrot.lane.b32.xlu0 %v286, 8
      %v303 = vpop.permute.xlu0 %302
      %304 = vrot.lane.b32.xlu0 %v287, 8
      %v305 = vpop.permute.xlu0 %304
      %306 = vrot.lane.b32.xlu0 %v288, 8
      %v307 = vpop.permute.xlu0 %306
      %308 = vrot.lane.b32.xlu0 %v289, 8
      %v309 = vpop.permute.xlu0 %308
      %310 = vrot.lane.b32.xlu0 %v290, 8
      %v311 = vpop.permute.xlu0 %310
      %312 = vrot.lane.b32.xlu0 %v291, 8
      %v313 = vpop.permute.xlu0 %312
      %314 = vrot.lane.b32.xlu0 %v292, 8
      %v315 = vpop.permute.xlu0 %314
      %316 = vrot.lane.b32.xlu0 %v293, 8
      %v317 = vpop.permute.xlu0 %316
      %vm326 = vcmask 130112
      %327 = vst.msk [vmem:[#allocation4] sm:$0xff] %vm326, %v303
      %328 = vst.msk [vmem:[#allocation4 + $0x8] sm:$0xff] %vm326, %v305
      %329 = vst.msk [vmem:[#allocation4 + $0x10] sm:$0xff] %vm326, %v307
      %330 = vst.msk [vmem:[#allocation4 + $0x18] sm:$0xff] %vm326, %v309
      %331 = vst.msk [vmem:[#allocation4 + $0x20] sm:$0xff] %vm326, %v311
      %332 = vst.msk [vmem:[#allocation4 + $0x28] sm:$0xff] %vm326, %v313
      %333 = vst.msk [vmem:[#allocation4 + $0x30] sm:$0xff] %vm326, %v315
      %334 = vst.msk [vmem:[#allocation4 + $0x38] sm:$0xff] %vm326, %v317
      %v335 = vld [vmem:[#allocation2 + $0x2] sm:$0xff]
      %v336 = vld [vmem:[#allocation2 + $0x12] sm:$0xff]
      %v337 = vld [vmem:[#allocation2 + $0x22] sm:$0xff]
      %v338 = vld [vmem:[#allocation2 + $0x32] sm:$0xff]
      %v339 = vld [vmem:[#allocation2 + $0x42] sm:$0xff]
      %v340 = vld [vmem:[#allocation2 + $0x52] sm:$0xff]
      %v341 = vld [vmem:[#allocation2 + $0x62] sm:$0xff]
      %v342 = vld [vmem:[#allocation2 + $0x72] sm:$0xff]
      %351 = vrot.lane.b32.xlu0 %v335, 16
      %v352 = vpop.permute.xlu0 %351
      %353 = vrot.lane.b32.xlu0 %v336, 16
      %v354 = vpop.permute.xlu0 %353
      %355 = vrot.lane.b32.xlu0 %v337, 16
      %v356 = vpop.permute.xlu0 %355
      %357 = vrot.lane.b32.xlu0 %v338, 16
      %v358 = vpop.permute.xlu0 %357
      %359 = vrot.lane.b32.xlu0 %v339, 16
      %v360 = vpop.permute.xlu0 %359
      %361 = vrot.lane.b32.xlu0 %v340, 16
      %v362 = vpop.permute.xlu0 %361
      %363 = vrot.lane.b32.xlu0 %v341, 16
      %v364 = vpop.permute.xlu0 %363
      %365 = vrot.lane.b32.xlu0 %v342, 16
      %v366 = vpop.permute.xlu0 %365
      %vm375 = vcmask 195712
      %376 = vst.msk [vmem:[#allocation4] sm:$0xff] %vm375, %v352
      %377 = vst.msk [vmem:[#allocation4 + $0x8] sm:$0xff] %vm375, %v354
      %378 = vst.msk [vmem:[#allocation4 + $0x10] sm:$0xff] %vm375, %v356
      %379 = vst.msk [vmem:[#allocation4 + $0x18] sm:$0xff] %vm375, %v358
      %380 = vst.msk [vmem:[#allocation4 + $0x20] sm:$0xff] %vm375, %v360
      %381 = vst.msk [vmem:[#allocation4 + $0x28] sm:$0xff] %vm375, %v362
      %382 = vst.msk [vmem:[#allocation4 + $0x30] sm:$0xff] %vm375, %v364
      %383 = vst.msk [vmem:[#allocation4 + $0x38] sm:$0xff] %vm375, %v366
      %v384 = vld [vmem:[%s261] sm:$0xff]
      %v385 = vld [vmem:[%s261 + $0x10] sm:$0xff]
      %v386 = vld [vmem:[%s261 + $0x20] sm:$0xff]
      %v387 = vld [vmem:[%s261 + $0x30] sm:$0xff]
      %v388 = vld [vmem:[%s261 + $0x40] sm:$0xff]
      %v389 = vld [vmem:[%s261 + $0x50] sm:$0xff]
      %v390 = vld [vmem:[%s261 + $0x60] sm:$0xff]
      %v391 = vld [vmem:[%s261 + $0x70] sm:$0xff]
      %400 = vrot.lane.b32.xlu0 %v384, 24
      %v401 = vpop.permute.xlu0 %400
      %402 = vrot.lane.b32.xlu0 %v385, 24
      %v403 = vpop.permute.xlu0 %402
      %404 = vrot.lane.b32.xlu0 %v386, 24
      %v405 = vpop.permute.xlu0 %404
      %406 = vrot.lane.b32.xlu0 %v387, 24
      %v407 = vpop.permute.xlu0 %406
      %408 = vrot.lane.b32.xlu0 %v388, 24
      %v409 = vpop.permute.xlu0 %408
      %410 = vrot.lane.b32.xlu0 %v389, 24
      %v411 = vpop.permute.xlu0 %410
      %412 = vrot.lane.b32.xlu0 %v390, 24
      %v413 = vpop.permute.xlu0 %412
      %414 = vrot.lane.b32.xlu0 %v391, 24
      %v415 = vpop.permute.xlu0 %414
      %vm424 = vcmask 261312
      %425 = vst.msk [vmem:[#allocation4] sm:$0xff] %vm424, %v401
      %426 = vst.msk [vmem:[#allocation4 + $0x8] sm:$0xff] %vm424, %v403
      %427 = vst.msk [vmem:[#allocation4 + $0x10] sm:$0xff] %vm424, %v405
      %428 = vst.msk [vmem:[#allocation4 + $0x18] sm:$0xff] %vm424, %v407
      %429 = vst.msk [vmem:[#allocation4 + $0x20] sm:$0xff] %vm424, %v409
      %430 = vst.msk [vmem:[#allocation4 + $0x28] sm:$0xff] %vm424, %v411
      %431 = vst.msk [vmem:[#allocation4 + $0x30] sm:$0xff] %vm424, %v413
      %432 = vst.msk [vmem:[#allocation4 + $0x38] sm:$0xff] %vm424, %v415
      %v433 = vld [vmem:[%s261 + $0x1] sm:$0xff]
      %v434 = vld [vmem:[%s261 + $0x11] sm:$0xff]
      %v435 = vld [vmem:[%s261 + $0x21] sm:$0xff]
      %v436 = vld [vmem:[%s261 + $0x31] sm:$0xff]
      %v437 = vld [vmem:[%s261 + $0x41] sm:$0xff]
      %v438 = vld [vmem:[%s261 + $0x51] sm:$0xff]
      %v439 = vld [vmem:[%s261 + $0x61] sm:$0xff]
      %v440 = vld [vmem:[%s261 + $0x71] sm:$0xff]
      %449 = vrot.lane.b32.xlu0 %v433, 32
      %v450 = vpop.permute.xlu0 %449
      %451 = vrot.lane.b32.xlu0 %v434, 32
      %v452 = vpop.permute.xlu0 %451
      %453 = vrot.lane.b32.xlu0 %v435, 32
      %v454 = vpop.permute.xlu0 %453
      %455 = vrot.lane.b32.xlu0 %v436, 32
      %v456 = vpop.permute.xlu0 %455
      %457 = vrot.lane.b32.xlu0 %v437, 32
      %v458 = vpop.permute.xlu0 %457
      %459 = vrot.lane.b32.xlu0 %v438, 32
      %v460 = vpop.permute.xlu0 %459
      %461 = vrot.lane.b32.xlu0 %v439, 32
      %v462 = vpop.permute.xlu0 %461
      %463 = vrot.lane.b32.xlu0 %v440, 32
      %v464 = vpop.permute.xlu0 %463
      %vm473 = vcmask 326912
      %474 = vst.msk [vmem:[#allocation4] sm:$0xff] %vm473, %v450
      %475 = vst.msk [vmem:[#allocation4 + $0x8] sm:$0xff] %vm473, %v452
      %476 = vst.msk [vmem:[#allocation4 + $0x10] sm:$0xff] %vm473, %v454
      %477 = vst.msk [vmem:[#allocation4 + $0x18] sm:$0xff] %vm473, %v456
      %478 = vst.msk [vmem:[#allocation4 + $0x20] sm:$0xff] %vm473, %v458
      %479 = vst.msk [vmem:[#allocation4 + $0x28] sm:$0xff] %vm473, %v460
      %480 = vst.msk [vmem:[#allocation4 + $0x30] sm:$0xff] %vm473, %v462
      %481 = vst.msk [vmem:[#allocation4 + $0x38] sm:$0xff] %vm473, %v464
      %v482 = vld [vmem:[%s261 + $0x2] sm:$0xff]
      %v483 = vld [vmem:[%s261 + $0x12] sm:$0xff]
      %v484 = vld [vmem:[%s261 + $0x22] sm:$0xff]
      %v485 = vld [vmem:[%s261 + $0x32] sm:$0xff]
      %v486 = vld [vmem:[%s261 + $0x42] sm:$0xff]
      %v487 = vld [vmem:[%s261 + $0x52] sm:$0xff]
      %v488 = vld [vmem:[%s261 + $0x62] sm:$0xff]
      %v489 = vld [vmem:[%s261 + $0x72] sm:$0xff]
      %498 = vrot.lane.b32.xlu0 %v482, 40
      %v499 = vpop.permute.xlu0 %498
      %500 = vrot.lane.b32.xlu0 %v483, 40
      %v501 = vpop.permute.xlu0 %500
      %502 = vrot.lane.b32.xlu0 %v484, 40
      %v503 = vpop.permute.xlu0 %502
      %504 = vrot.lane.b32.xlu0 %v485, 40
      %v505 = vpop.permute.xlu0 %504
      %506 = vrot.lane.b32.xlu0 %v486, 40
      %v507 = vpop.permute.xlu0 %506
      %508 = vrot.lane.b32.xlu0 %v487, 40
      %v509 = vpop.permute.xlu0 %508
      %510 = vrot.lane.b32.xlu0 %v488, 40
      %v511 = vpop.permute.xlu0 %510
      %512 = vrot.lane.b32.xlu0 %v489, 40
      %v513 = vpop.permute.xlu0 %512
      %vm522 = vcmask 392512
      %523 = vst.msk [vmem:[#allocation4] sm:$0xff] %vm522, %v499
      %524 = vst.msk [vmem:[#allocation4 + $0x8] sm:$0xff] %vm522, %v501
      %525 = vst.msk [vmem:[#allocation4 + $0x10] sm:$0xff] %vm522, %v503
      %526 = vst.msk [vmem:[#allocation4 + $0x18] sm:$0xff] %vm522, %v505
      %527 = vst.msk [vmem:[#allocation4 + $0x20] sm:$0xff] %vm522, %v507
      %528 = vst.msk [vmem:[#allocation4 + $0x28] sm:$0xff] %vm522, %v509
      %529 = vst.msk [vmem:[#allocation4 + $0x30] sm:$0xff] %vm522, %v511
      %530 = vst.msk [vmem:[#allocation4 + $0x38] sm:$0xff] %vm522, %v513
      %s531 = scalar_lea.vmem [#allocation2], 32
      %v532 = vld [vmem:[%s531] sm:$0xff]
      %v533 = vld [vmem:[%s531 + $0x10] sm:$0xff]
      %v534 = vld [vmem:[%s531 + $0x20] sm:$0xff]
      %v535 = vld [vmem:[%s531 + $0x30] sm:$0xff]
      %v536 = vld [vmem:[%s531 + $0x40] sm:$0xff]
      %v537 = vld [vmem:[%s531 + $0x50] sm:$0xff]
      %v538 = vld [vmem:[%s531 + $0x60] sm:$0xff]
      %v539 = vld [vmem:[%s531 + $0x70] sm:$0xff]
      %548 = vrot.lane.b32.xlu0 %v532, 48
      %v549 = vpop.permute.xlu0 %548
      %550 = vrot.lane.b32.xlu0 %v533, 48
      %v551 = vpop.permute.xlu0 %550
      %552 = vrot.lane.b32.xlu0 %v534, 48
      %v553 = vpop.permute.xlu0 %552
      %554 = vrot.lane.b32.xlu0 %v535, 48
      %v555 = vpop.permute.xlu0 %554
      %556 = vrot.lane.b32.xlu0 %v536, 48
      %v557 = vpop.permute.xlu0 %556
      %558 = vrot.lane.b32.xlu0 %v537, 48
      %v559 = vpop.permute.xlu0 %558
      %560 = vrot.lane.b32.xlu0 %v538, 48
      %v561 = vpop.permute.xlu0 %560
      %562 = vrot.lane.b32.xlu0 %v539, 48
      %v563 = vpop.permute.xlu0 %562
      %vm572 = vcmask 458112
      %573 = vst.msk [vmem:[#allocation4] sm:$0xff] %vm572, %v549
      %574 = vst.msk [vmem:[#allocation4 + $0x8] sm:$0xff] %vm572, %v551
      %575 = vst.msk [vmem:[#allocation4 + $0x10] sm:$0xff] %vm572, %v553
      %576 = vst.msk [vmem:[#allocation4 + $0x18] sm:$0xff] %vm572, %v555
      %577 = vst.msk [vmem:[#allocation4 + $0x20] sm:$0xff] %vm572, %v557
      %578 = vst.msk [vmem:[#allocation4 + $0x28] sm:$0xff] %vm572, %v559
      %579 = vst.msk [vmem:[#allocation4 + $0x30] sm:$0xff] %vm572, %v561
      %580 = vst.msk [vmem:[#allocation4 + $0x38] sm:$0xff] %vm572, %v563
      %v581 = vld [vmem:[%s531 + $0x1] sm:$0xff]
      %v582 = vld [vmem:[%s531 + $0x11] sm:$0xff]
      %v583 = vld [vmem:[%s531 + $0x21] sm:$0xff]
      %v584 = vld [vmem:[%s531 + $0x31] sm:$0xff]
      %v585 = vld [vmem:[%s531 + $0x41] sm:$0xff]
      %v586 = vld [vmem:[%s531 + $0x51] sm:$0xff]
      %v587 = vld [vmem:[%s531 + $0x61] sm:$0xff]
      %v588 = vld [vmem:[%s531 + $0x71] sm:$0xff]
      %597 = vrot.lane.b32.xlu0 %v581, 56
      %v598 = vpop.permute.xlu0 %597
      %599 = vrot.lane.b32.xlu0 %v582, 56
      %v600 = vpop.permute.xlu0 %599
      %601 = vrot.lane.b32.xlu0 %v583, 56
      %v602 = vpop.permute.xlu0 %601
      %603 = vrot.lane.b32.xlu0 %v584, 56
      %v604 = vpop.permute.xlu0 %603
      %605 = vrot.lane.b32.xlu0 %v585, 56
      %v606 = vpop.permute.xlu0 %605
      %607 = vrot.lane.b32.xlu0 %v586, 56
      %v608 = vpop.permute.xlu0 %607
      %609 = vrot.lane.b32.xlu0 %v587, 56
      %v610 = vpop.permute.xlu0 %609
      %611 = vrot.lane.b32.xlu0 %v588, 56
      %v612 = vpop.permute.xlu0 %611
      %vm621 = vcmask 523712
      %622 = vst.msk [vmem:[#allocation4] sm:$0xff] %vm621, %v598
      %623 = vst.msk [vmem:[#allocation4 + $0x8] sm:$0xff] %vm621, %v600
      %624 = vst.msk [vmem:[#allocation4 + $0x10] sm:$0xff] %vm621, %v602
      %625 = vst.msk [vmem:[#allocation4 + $0x18] sm:$0xff] %vm621, %v604
      %626 = vst.msk [vmem:[#allocation4 + $0x20] sm:$0xff] %vm621, %v606
      %627 = vst.msk [vmem:[#allocation4 + $0x28] sm:$0xff] %vm621, %v608
      %628 = vst.msk [vmem:[#allocation4 + $0x30] sm:$0xff] %vm621, %v610
      %629 = vst.msk [vmem:[#allocation4 + $0x38] sm:$0xff] %vm621, %v612
      %v630 = vld [vmem:[%s531 + $0x2] sm:$0xff]
      %v631 = vld [vmem:[%s531 + $0x12] sm:$0xff]
      %v632 = vld [vmem:[%s531 + $0x22] sm:$0xff]
      %v633 = vld [vmem:[%s531 + $0x32] sm:$0xff]
      %v634 = vld [vmem:[%s531 + $0x42] sm:$0xff]
      %v635 = vld [vmem:[%s531 + $0x52] sm:$0xff]
      %v636 = vld [vmem:[%s531 + $0x62] sm:$0xff]
      %v637 = vld [vmem:[%s531 + $0x72] sm:$0xff]
      %646 = vrot.lane.b32.xlu0 %v630, 64
      %v647 = vpop.permute.xlu0 %646
      %648 = vrot.lane.b32.xlu0 %v631, 64
      %v649 = vpop.permute.xlu0 %648
      %650 = vrot.lane.b32.xlu0 %v632, 64
      %v651 = vpop.permute.xlu0 %650
      %652 = vrot.lane.b32.xlu0 %v633, 64
      %v653 = vpop.permute.xlu0 %652
      %654 = vrot.lane.b32.xlu0 %v634, 64
      %v655 = vpop.permute.xlu0 %654
      %656 = vrot.lane.b32.xlu0 %v635, 64
      %v657 = vpop.permute.xlu0 %656
      %658 = vrot.lane.b32.xlu0 %v636, 64
      %v659 = vpop.permute.xlu0 %658
      %660 = vrot.lane.b32.xlu0 %v637, 64
      %v661 = vpop.permute.xlu0 %660
      %vm670 = vcmask 589312
      %671 = vst.msk [vmem:[#allocation4] sm:$0xff] %vm670, %v647
      %672 = vst.msk [vmem:[#allocation4 + $0x8] sm:$0xff] %vm670, %v649
      %673 = vst.msk [vmem:[#allocation4 + $0x10] sm:$0xff] %vm670, %v651
      %674 = vst.msk [vmem:[#allocation4 + $0x18] sm:$0xff] %vm670, %v653
      %675 = vst.msk [vmem:[#allocation4 + $0x20] sm:$0xff] %vm670, %v655
      %676 = vst.msk [vmem:[#allocation4 + $0x28] sm:$0xff] %vm670, %v657
      %677 = vst.msk [vmem:[#allocation4 + $0x30] sm:$0xff] %vm670, %v659
      %678 = vst.msk [vmem:[#allocation4 + $0x38] sm:$0xff] %vm670, %v661
      %v679 = vld [vmem:[#allocation4] sm:$0xff]
      %v680 = vld [vmem:[#allocation4 + $0x8] sm:$0xff]
      %v681 = vld [vmem:[#allocation4 + $0x10] sm:$0xff]
      %v682 = vld [vmem:[#allocation4 + $0x18] sm:$0xff]
      %v683 = vld [vmem:[#allocation4 + $0x20] sm:$0xff]
      %v684 = vld [vmem:[#allocation4 + $0x28] sm:$0xff]
      %v685 = vld [vmem:[#allocation4 + $0x30] sm:$0xff]
      %v686 = vld [vmem:[#allocation4 + $0x38] sm:$0xff]
      %v687 = vld [vmem:[%s1] sm:$0xff]
      %v688 = vld [vmem:[%s1 + $0x8] sm:$0xff]
      %v689 = vld [vmem:[%s1 + $0x10] sm:$0xff]
      %v690 = vld [vmem:[%s1 + $0x18] sm:$0xff]
      %v691 = vld [vmem:[%s1 + $0x20] sm:$0xff]
      %v692 = vld [vmem:[%s1 + $0x28] sm:$0xff]
      %v693 = vld [vmem:[%s1 + $0x30] sm:$0xff]
      %v694 = vld [vmem:[%s1 + $0x38] sm:$0xff]
      %v695 = vld [vmem:[%s1 + $0x40] sm:$0xff]
      %v696 = vld [vmem:[%s2] sm:$0x1]
      %v698 = vperm.slane %v696, 0
      %vm700 = vcmask 588800
      %v702 = vsel %vm700, %v679, 0
      %v705 = vsel %vm700, %v680, 0
      %v708 = vsel %vm700, %v681, 0
      %v711 = vsel %vm700, %v682, 0
      %v714 = vsel %vm700, %v683, 0
      %v717 = vsel %vm700, %v684, 0
      %v720 = vsel %vm700, %v685, 0
      %v723 = vsel %vm700, %v686, 0
      %725 = vmatpush.msra.mxu0 0.0
      %726 = vmatpush.msra.mxu0 0.0
      %727 = vmatpush.msra.mxu0 0.0
      %728 = vmatpush.msra.mxu0 0.0
      %729 = vmatpush.msra.mxu0 0.0
      %730 = vmatpush.msra.mxu0 0.0
      %731 = vmatpush.msra.mxu0 0.0
      %732 = vmatpush.msra.mxu0 %v695
      %733 = vmatpush.msra.mxu0 %v694
      %734 = vmatpush.msra.mxu0 %v693
      %735 = vmatpush.msra.mxu0 %v692
      %736 = vmatpush.msra.mxu0 %v691
      %737 = vmatpush.msra.mxu0 %v690
      %738 = vmatpush.msra.mxu0 %v689
      %739 = vmatpush.msra.mxu0 %v688
      %740 = vmatpush.msra.mxu0 %v687
      %741 = vmatmul.f32.gmra.mxu0 %v702
      %v742 = vpop.f32.mrf.mxu0
      %v743 = vadd.f32 %v698, %v742
      %744 = vmatmul.f32.gmra.mxu0 %v705
      %v745 = vpop.f32.mrf.mxu0
      %v746 = vadd.f32 %v698, %v745
      %747 = vmatmul.f32.gmra.mxu0 %v708
      %v748 = vpop.f32.mrf.mxu0
      %v749 = vadd.f32 %v698, %v748
      %750 = vmatmul.f32.gmra.mxu0 %v711
      %v751 = vpop.f32.mrf.mxu0
      %v752 = vadd.f32 %v698, %v751
      %753 = vmatmul.f32.gmra.mxu0 %v714
      %v754 = vpop.f32.mrf.mxu0
      %v755 = vadd.f32 %v698, %v754
      %756 = vmatmul.f32.gmra.mxu0 %v717
      %v757 = vpop.f32.mrf.mxu0
      %v758 = vadd.f32 %v698, %v757
      %759 = vmatmul.f32.gmra.mxu0 %v720
      %v760 = vpop.f32.mrf.mxu0
      %v761 = vadd.f32 %v698, %v760
      %762 = vmatmul.f32.gmra.mxu0 %v723
      %v763 = vpop.f32.mrf.mxu0
      %v764 = vadd.f32 %v698, %v763
      %765 = vdwg.mxu0
      %v766 = vmax.f32 %v743, 0.0
      %v767 = vmax.f32 %v746, 0.0
      %v768 = vmax.f32 %v749, 0.0
      %v769 = vmax.f32 %v752, 0.0
      %v770 = vmax.f32 %v755, 0.0
      %v771 = vmax.f32 %v758, 0.0
      %v772 = vmax.f32 %v761, 0.0
      %v773 = vmax.f32 %v764, 0.0
      %vm774 = vcmask 261120
      %775 = vst.msk [vmem:[#allocation3] sm:$0xff] %vm774, 0.0
      %vm776 = vcmask 254976
      %777 = vst.msk [vmem:[#allocation3 + $0x8] sm:$0x3] %vm776, 0.0
      %s778 = scalar_lea.vmem [#allocation3], 144
      %779 = vst.msk [vmem:[%s778] sm:$0xff] %vm774, 0.0
      %780 = vst.msk [vmem:[%s778 + $0x8] sm:$0x3] %vm776, 0.0
      %vm781 = vcmask 253952
      %782 = vst.msk [vmem:[#allocation3] sm:$0x1] %vm781, 0.0
      %783 = vst.msk [vmem:[#allocation3 + $0x10] sm:$0x1] %vm781, 0.0
      %784 = vst.msk [vmem:[#allocation3 + $0x20] sm:$0x1] %vm781, 0.0
      %785 = vst.msk [vmem:[#allocation3 + $0x30] sm:$0x1] %vm781, 0.0
      %786 = vst.msk [vmem:[#allocation3 + $0x40] sm:$0x1] %vm781, 0.0
      %787 = vst.msk [vmem:[#allocation3 + $0x50] sm:$0x1] %vm781, 0.0
      %788 = vst.msk [vmem:[#allocation3 + $0x60] sm:$0x1] %vm781, 0.0
      %789 = vst.msk [vmem:[#allocation3 + $0x70] sm:$0x1] %vm781, 0.0
      %790 = vst.msk [vmem:[#allocation3 + $0x80] sm:$0x1] %vm781, 0.0
      %791 = vst.msk [vmem:[#allocation3 + $0x90] sm:$0x1] %vm781, 0.0
      %792 = vst.msk [vmem:[#allocation3 + $0x9] sm:$0x1] %vm781, 0.0
      %793 = vst.msk [vmem:[#allocation3 + $0x19] sm:$0x1] %vm781, 0.0
      %794 = vst.msk [vmem:[#allocation3 + $0x29] sm:$0x1] %vm781, 0.0
      %795 = vst.msk [vmem:[#allocation3 + $0x39] sm:$0x1] %vm781, 0.0
      %796 = vst.msk [vmem:[#allocation3 + $0x49] sm:$0x1] %vm781, 0.0
      %797 = vst.msk [vmem:[#allocation3 + $0x59] sm:$0x1] %vm781, 0.0
      %798 = vst.msk [vmem:[#allocation3 + $0x69] sm:$0x1] %vm781, 0.0
      %799 = vst.msk [vmem:[#allocation3 + $0x79] sm:$0x1] %vm781, 0.0
      %800 = vst.msk [vmem:[#allocation3 + $0x89] sm:$0x1] %vm781, 0.0
      %801 = vst.msk [vmem:[#allocation3 + $0x99] sm:$0x1] %vm781, 0.0
      %s802 = scalar_lea.vmem [#allocation3], 16
      %803 = vst.msk [vmem:[%s802 + $0x1] sm:$0xff] %vm774, %v766
      %804 = vst.msk [vmem:[%s802 + $0x11] sm:$0xff] %vm774, %v767
      %805 = vst.msk [vmem:[%s802 + $0x21] sm:$0xff] %vm774, %v768
      %806 = vst.msk [vmem:[%s802 + $0x31] sm:$0xff] %vm774, %v769
      %807 = vst.msk [vmem:[%s802 + $0x41] sm:$0xff] %vm774, %v770
      %808 = vst.msk [vmem:[%s802 + $0x51] sm:$0xff] %vm774, %v771
      %809 = vst.msk [vmem:[%s802 + $0x61] sm:$0xff] %vm774, %v772
      %810 = vst.msk [vmem:[%s802 + $0x71] sm:$0xff] %vm774, %v773
      %v811 = vld [vmem:[#allocation3] sm:$0xff]
      %v812 = vld [vmem:[#allocation3 + $0x10] sm:$0xff]
      %v813 = vld [vmem:[#allocation3 + $0x20] sm:$0xff]
      %v814 = vld [vmem:[#allocation3 + $0x30] sm:$0xff]
      %v815 = vld [vmem:[#allocation3 + $0x40] sm:$0xff]
      %v816 = vld [vmem:[#allocation3 + $0x50] sm:$0xff]
      %v817 = vld [vmem:[#allocation3 + $0x60] sm:$0xff]
      %v818 = vld [vmem:[#allocation3 + $0x70] sm:$0xff]
      %819 = vst.msk [vmem:[#allocation5] sm:$0xff] %vm774, %v811
      %820 = vst.msk [vmem:[#allocation5 + $0x18] sm:$0xff] %vm774, %v812
      %821 = vst.msk [vmem:[#allocation5 + $0x30] sm:$0xff] %vm774, %v813
      %822 = vst.msk [vmem:[#allocation5 + $0x48] sm:$0xff] %vm774, %v814
      %823 = vst.msk [vmem:[#allocation5 + $0x60] sm:$0xff] %vm774, %v815
      %824 = vst.msk [vmem:[#allocation5 + $0x78] sm:$0xff] %vm774, %v816
      %825 = vst.msk [vmem:[#allocation5 + $0x90] sm:$0xff] %vm774, %v817
      %826 = vst.msk [vmem:[#allocation5 + $0xa8] sm:$0xff] %vm774, %v818
      %v827 = vld [vmem:[#allocation3 + $0x1] sm:$0xff]
      %v828 = vld [vmem:[#allocation3 + $0x11] sm:$0xff]
      %v829 = vld [vmem:[#allocation3 + $0x21] sm:$0xff]
      %v830 = vld [vmem:[#allocation3 + $0x31] sm:$0xff]
      %v831 = vld [vmem:[#allocation3 + $0x41] sm:$0xff]
      %v832 = vld [vmem:[#allocation3 + $0x51] sm:$0xff]
      %v833 = vld [vmem:[#allocation3 + $0x61] sm:$0xff]
      %v834 = vld [vmem:[#allocation3 + $0x71] sm:$0xff]
      %843 = vrot.lane.b32.xlu0 %v827, 32
      %v844 = vpop.permute.xlu0 %843
      %845 = vrot.lane.b32.xlu0 %v828, 32
      %v846 = vpop.permute.xlu0 %845
      %847 = vrot.lane.b32.xlu0 %v829, 32
      %v848 = vpop.permute.xlu0 %847
      %849 = vrot.lane.b32.xlu0 %v830, 32
      %v850 = vpop.permute.xlu0 %849
      %851 = vrot.lane.b32.xlu0 %v831, 32
      %v852 = vpop.permute.xlu0 %851
      %853 = vrot.lane.b32.xlu0 %v832, 32
      %v854 = vpop.permute.xlu0 %853
      %855 = vrot.lane.b32.xlu0 %v833, 32
      %v856 = vpop.permute.xlu0 %855
      %857 = vrot.lane.b32.xlu0 %v834, 32
      %v858 = vpop.permute.xlu0 %857
      %vm867 = vcmask 523520
      %868 = vst.msk [vmem:[#allocation5] sm:$0xff] %vm867, %v844
      %869 = vst.msk [vmem:[#allocation5 + $0x18] sm:$0xff] %vm867, %v846
      %870 = vst.msk [vmem:[#allocation5 + $0x30] sm:$0xff] %vm867, %v848
      %871 = vst.msk [vmem:[#allocation5 + $0x48] sm:$0xff] %vm867, %v850
      %872 = vst.msk [vmem:[#allocation5 + $0x60] sm:$0xff] %vm867, %v852
      %873 = vst.msk [vmem:[#allocation5 + $0x78] sm:$0xff] %vm867, %v854
      %874 = vst.msk [vmem:[#allocation5 + $0x90] sm:$0xff] %vm867, %v856
      %875 = vst.msk [vmem:[#allocation5 + $0xa8] sm:$0xff] %vm867, %v858
      %v876 = vld [vmem:[#allocation3 + $0x2] sm:$0xff]
      %v877 = vld [vmem:[#allocation3 + $0x12] sm:$0xff]
      %v878 = vld [vmem:[#allocation3 + $0x22] sm:$0xff]
      %v879 = vld [vmem:[#allocation3 + $0x32] sm:$0xff]
      %v880 = vld [vmem:[#allocation3 + $0x42] sm:$0xff]
      %v881 = vld [vmem:[#allocation3 + $0x52] sm:$0xff]
      %v882 = vld [vmem:[#allocation3 + $0x62] sm:$0xff]
      %v883 = vld [vmem:[#allocation3 + $0x72] sm:$0xff]
      %892 = vrot.lane.b32.xlu0 %v876, 64
      %v893 = vpop.permute.xlu0 %892
      %894 = vrot.lane.b32.xlu0 %v877, 64
      %v895 = vpop.permute.xlu0 %894
      %896 = vrot.lane.b32.xlu0 %v878, 64
      %v897 = vpop.permute.xlu0 %896
      %898 = vrot.lane.b32.xlu0 %v879, 64
      %v899 = vpop.permute.xlu0 %898
      %900 = vrot.lane.b32.xlu0 %v880, 64
      %v901 = vpop.permute.xlu0 %900
      %902 = vrot.lane.b32.xlu0 %v881, 64
      %v903 = vpop.permute.xlu0 %902
      %904 = vrot.lane.b32.xlu0 %v882, 64
      %v905 = vpop.permute.xlu0 %904
      %906 = vrot.lane.b32.xlu0 %v883, 64
      %v907 = vpop.permute.xlu0 %906
      %vm916 = vcmask 785920
      %917 = vst.msk [vmem:[#allocation5] sm:$0xff] %vm916, %v893
      %918 = vst.msk [vmem:[#allocation5 + $0x18] sm:$0xff] %vm916, %v895
      %919 = vst.msk [vmem:[#allocation5 + $0x30] sm:$0xff] %vm916, %v897
      %920 = vst.msk [vmem:[#allocation5 + $0x48] sm:$0xff] %vm916, %v899
      %921 = vst.msk [vmem:[#allocation5 + $0x60] sm:$0xff] %vm916, %v901
      %922 = vst.msk [vmem:[#allocation5 + $0x78] sm:$0xff] %vm916, %v903
      %923 = vst.msk [vmem:[#allocation5 + $0x90] sm:$0xff] %vm916, %v905
      %924 = vst.msk [vmem:[#allocation5 + $0xa8] sm:$0xff] %vm916, %v907
      %v925 = vld [vmem:[%s802] sm:$0xff]
      %v926 = vld [vmem:[%s802 + $0x10] sm:$0xff]
      %v927 = vld [vmem:[%s802 + $0x20] sm:$0xff]
      %v928 = vld [vmem:[%s802 + $0x30] sm:$0xff]
      %v929 = vld [vmem:[%s802 + $0x40] sm:$0xff]
      %v930 = vld [vmem:[%s802 + $0x50] sm:$0xff]
      %v931 = vld [vmem:[%s802 + $0x60] sm:$0xff]
      %v932 = vld [vmem:[%s802 + $0x70] sm:$0xff]
      %941 = vrot.lane.b32.xlu0 %v925, 96
      %v942 = vpop.permute.xlu0 %941
      %943 = vrot.lane.b32.xlu0 %v926, 96
      %v944 = vpop.permute.xlu0 %943
      %945 = vrot.lane.b32.xlu0 %v927, 96
      %v946 = vpop.permute.xlu0 %945
      %947 = vrot.lane.b32.xlu0 %v928, 96
      %v948 = vpop.permute.xlu0 %947
      %949 = vrot.lane.b32.xlu0 %v929, 96
      %v950 = vpop.permute.xlu0 %949
      %951 = vrot.lane.b32.xlu0 %v930, 96
      %v952 = vpop.permute.xlu0 %951
      %953 = vrot.lane.b32.xlu0 %v931, 96
      %v954 = vpop.permute.xlu0 %953
      %955 = vrot.lane.b32.xlu0 %v932, 96
      %v956 = vpop.permute.xlu0 %955
      %vm965 = vcmask 1048320
      %966 = vst.msk [vmem:[#allocation5] sm:$0xff] %vm965, %v942
      %967 = vst.msk [vmem:[#allocation5 + $0x18] sm:$0xff] %vm965, %v944
      %968 = vst.msk [vmem:[#allocation5 + $0x30] sm:$0xff] %vm965, %v946
      %969 = vst.msk [vmem:[#allocation5 + $0x48] sm:$0xff] %vm965, %v948
      %970 = vst.msk [vmem:[#allocation5 + $0x60] sm:$0xff] %vm965, %v950
      %971 = vst.msk [vmem:[#allocation5 + $0x78] sm:$0xff] %vm965, %v952
      %972 = vst.msk [vmem:[#allocation5 + $0x90] sm:$0xff] %vm965, %v954
      %973 = vst.msk [vmem:[#allocation5 + $0xa8] sm:$0xff] %vm965, %v956
      %v974 = vld [vmem:[%s802 + $0x1] sm:$0xff]
      %v975 = vld [vmem:[%s802 + $0x11] sm:$0xff]
      %v976 = vld [vmem:[%s802 + $0x21] sm:$0xff]
      %v977 = vld [vmem:[%s802 + $0x31] sm:$0xff]
      %v978 = vld [vmem:[%s802 + $0x41] sm:$0xff]
      %v979 = vld [vmem:[%s802 + $0x51] sm:$0xff]
      %v980 = vld [vmem:[%s802 + $0x61] sm:$0xff]
      %v981 = vld [vmem:[%s802 + $0x71] sm:$0xff]
      %982 = vst.msk [vmem:[#allocation5 + $0x8] sm:$0xff] %vm774, %v974
      %983 = vst.msk [vmem:[#allocation5 + $0x20] sm:$0xff] %vm774, %v975
      %984 = vst.msk [vmem:[#allocation5 + $0x38] sm:$0xff] %vm774, %v976
      %985 = vst.msk [vmem:[#allocation5 + $0x50] sm:$0xff] %vm774, %v977
      %986 = vst.msk [vmem:[#allocation5 + $0x68] sm:$0xff] %vm774, %v978
      %987 = vst.msk [vmem:[#allocation5 + $0x80] sm:$0xff] %vm774, %v979
      %988 = vst.msk [vmem:[#allocation5 + $0x98] sm:$0xff] %vm774, %v980
      %989 = vst.msk [vmem:[#allocation5 + $0xb0] sm:$0xff] %vm774, %v981
      %v990 = vld [vmem:[%s802 + $0x2] sm:$0xff]
      %v991 = vld [vmem:[%s802 + $0x12] sm:$0xff]
      %v992 = vld [vmem:[%s802 + $0x22] sm:$0xff]
      %v993 = vld [vmem:[%s802 + $0x32] sm:$0xff]
      %v994 = vld [vmem:[%s802 + $0x42] sm:$0xff]
      %v995 = vld [vmem:[%s802 + $0x52] sm:$0xff]
      %v996 = vld [vmem:[%s802 + $0x62] sm:$0xff]
      %v997 = vld [vmem:[%s802 + $0x72] sm:$0xff]
      %1006 = vrot.lane.b32.xlu0 %v990, 32
      %v1007 = vpop.permute.xlu0 %1006
      %1008 = vrot.lane.b32.xlu0 %v991, 32
      %v1009 = vpop.permute.xlu0 %1008
      %1010 = vrot.lane.b32.xlu0 %v992, 32
      %v1011 = vpop.permute.xlu0 %1010
      %1012 = vrot.lane.b32.xlu0 %v993, 32
      %v1013 = vpop.permute.xlu0 %1012
      %1014 = vrot.lane.b32.xlu0 %v994, 32
      %v1015 = vpop.permute.xlu0 %1014
      %1016 = vrot.lane.b32.xlu0 %v995, 32
      %v1017 = vpop.permute.xlu0 %1016
      %1018 = vrot.lane.b32.xlu0 %v996, 32
      %v1019 = vpop.permute.xlu0 %1018
      %1020 = vrot.lane.b32.xlu0 %v997, 32
      %v1021 = vpop.permute.xlu0 %1020
      %1030 = vst.msk [vmem:[#allocation5 + $0x8] sm:$0xff] %vm867, %v1007
      %1031 = vst.msk [vmem:[#allocation5 + $0x20] sm:$0xff] %vm867, %v1009
      %1032 = vst.msk [vmem:[#allocation5 + $0x38] sm:$0xff] %vm867, %v1011
      %1033 = vst.msk [vmem:[#allocation5 + $0x50] sm:$0xff] %vm867, %v1013
      %1034 = vst.msk [vmem:[#allocation5 + $0x68] sm:$0xff] %vm867, %v1015
      %1035 = vst.msk [vmem:[#allocation5 + $0x80] sm:$0xff] %vm867, %v1017
      %1036 = vst.msk [vmem:[#allocation5 + $0x98] sm:$0xff] %vm867, %v1019
      %1037 = vst.msk [vmem:[#allocation5 + $0xb0] sm:$0xff] %vm867, %v1021
      %s1038 = scalar_lea.vmem [#allocation3], 32
      %v1039 = vld [vmem:[%s1038] sm:$0xff]
      %v1040 = vld [vmem:[%s1038 + $0x10] sm:$0xff]
      %v1041 = vld [vmem:[%s1038 + $0x20] sm:$0xff]
      %v1042 = vld [vmem:[%s1038 + $0x30] sm:$0xff]
      %v1043 = vld [vmem:[%s1038 + $0x40] sm:$0xff]
      %v1044 = vld [vmem:[%s1038 + $0x50] sm:$0xff]
      %v1045 = vld [vmem:[%s1038 + $0x60] sm:$0xff]
      %v1046 = vld [vmem:[%s1038 + $0x70] sm:$0xff]
      %1055 = vrot.lane.b32.xlu0 %v1039, 64
      %v1056 = vpop.permute.xlu0 %1055
      %1057 = vrot.lane.b32.xlu0 %v1040, 64
      %v1058 = vpop.permute.xlu0 %1057
      %1059 = vrot.lane.b32.xlu0 %v1041, 64
      %v1060 = vpop.permute.xlu0 %1059
      %1061 = vrot.lane.b32.xlu0 %v1042, 64
      %v1062 = vpop.permute.xlu0 %1061
      %1063 = vrot.lane.b32.xlu0 %v1043, 64
      %v1064 = vpop.permute.xlu0 %1063
      %1065 = vrot.lane.b32.xlu0 %v1044, 64
      %v1066 = vpop.permute.xlu0 %1065
      %1067 = vrot.lane.b32.xlu0 %v1045, 64
      %v1068 = vpop.permute.xlu0 %1067
      %1069 = vrot.lane.b32.xlu0 %v1046, 64
      %v1070 = vpop.permute.xlu0 %1069
      %1079 = vst.msk [vmem:[#allocation5 + $0x8] sm:$0xff] %vm916, %v1056
      %1080 = vst.msk [vmem:[#allocation5 + $0x20] sm:$0xff] %vm916, %v1058
      %1081 = vst.msk [vmem:[#allocation5 + $0x38] sm:$0xff] %vm916, %v1060
      %1082 = vst.msk [vmem:[#allocation5 + $0x50] sm:$0xff] %vm916, %v1062
      %1083 = vst.msk [vmem:[#allocation5 + $0x68] sm:$0xff] %vm916, %v1064
      %1084 = vst.msk [vmem:[#allocation5 + $0x80] sm:$0xff] %vm916, %v1066
      %1085 = vst.msk [vmem:[#allocation5 + $0x98] sm:$0xff] %vm916, %v1068
      %1086 = vst.msk [vmem:[#allocation5 + $0xb0] sm:$0xff] %vm916, %v1070
      %v1087 = vld [vmem:[%s1038 + $0x1] sm:$0xff]
      %v1088 = vld [vmem:[%s1038 + $0x11] sm:$0xff]
      %v1089 = vld [vmem:[%s1038 + $0x21] sm:$0xff]
      %v1090 = vld [vmem:[%s1038 + $0x31] sm:$0xff]
      %v1091 = vld [vmem:[%s1038 + $0x41] sm:$0xff]
      %v1092 = vld [vmem:[%s1038 + $0x51] sm:$0xff]
      %v1093 = vld [vmem:[%s1038 + $0x61] sm:$0xff]
      %v1094 = vld [vmem:[%s1038 + $0x71] sm:$0xff]
      %1103 = vrot.lane.b32.xlu0 %v1087, 96
      %v1104 = vpop.permute.xlu0 %1103
      %1105 = vrot.lane.b32.xlu0 %v1088, 96
      %v1106 = vpop.permute.xlu0 %1105
      %1107 = vrot.lane.b32.xlu0 %v1089, 96
      %v1108 = vpop.permute.xlu0 %1107
      %1109 = vrot.lane.b32.xlu0 %v1090, 96
      %v1110 = vpop.permute.xlu0 %1109
      %1111 = vrot.lane.b32.xlu0 %v1091, 96
      %v1112 = vpop.permute.xlu0 %1111
      %1113 = vrot.lane.b32.xlu0 %v1092, 96
      %v1114 = vpop.permute.xlu0 %1113
      %1115 = vrot.lane.b32.xlu0 %v1093, 96
      %v1116 = vpop.permute.xlu0 %1115
      %1117 = vrot.lane.b32.xlu0 %v1094, 96
      %v1118 = vpop.permute.xlu0 %1117
      %1127 = vst.msk [vmem:[#allocation5 + $0x8] sm:$0xff] %vm965, %v1104
      %1128 = vst.msk [vmem:[#allocation5 + $0x20] sm:$0xff] %vm965, %v1106
      %1129 = vst.msk [vmem:[#allocation5 + $0x38] sm:$0xff] %vm965, %v1108
      %1130 = vst.msk [vmem:[#allocation5 + $0x50] sm:$0xff] %vm965, %v1110
      %1131 = vst.msk [vmem:[#allocation5 + $0x68] sm:$0xff] %vm965, %v1112
      %1132 = vst.msk [vmem:[#allocation5 + $0x80] sm:$0xff] %vm965, %v1114
      %1133 = vst.msk [vmem:[#allocation5 + $0x98] sm:$0xff] %vm965, %v1116
      %1134 = vst.msk [vmem:[#allocation5 + $0xb0] sm:$0xff] %vm965, %v1118
      %v1135 = vld [vmem:[%s1038 + $0x2] sm:$0xff]
      %v1136 = vld [vmem:[%s1038 + $0x12] sm:$0xff]
      %v1137 = vld [vmem:[%s1038 + $0x22] sm:$0xff]
      %v1138 = vld [vmem:[%s1038 + $0x32] sm:$0xff]
      %v1139 = vld [vmem:[%s1038 + $0x42] sm:$0xff]
      %v1140 = vld [vmem:[%s1038 + $0x52] sm:$0xff]
      %v1141 = vld [vmem:[%s1038 + $0x62] sm:$0xff]
      %v1142 = vld [vmem:[%s1038 + $0x72] sm:$0xff]
      %1143 = vst.msk [vmem:[#allocation5 + $0x10] sm:$0xff] %vm774, %v1135
      %1144 = vst.msk [vmem:[#allocation5 + $0x28] sm:$0xff] %vm774, %v1136
      %1145 = vst.msk [vmem:[#allocation5 + $0x40] sm:$0xff] %vm774, %v1137
      %1146 = vst.msk [vmem:[#allocation5 + $0x58] sm:$0xff] %vm774, %v1138
      %1147 = vst.msk [vmem:[#allocation5 + $0x70] sm:$0xff] %vm774, %v1139
      %1148 = vst.msk [vmem:[#allocation5 + $0x88] sm:$0xff] %vm774, %v1140
      %1149 = vst.msk [vmem:[#allocation5 + $0xa0] sm:$0xff] %vm774, %v1141
      %1150 = vst.msk [vmem:[#allocation5 + $0xb8] sm:$0xff] %vm774, %v1142
      %v1151 = vld [vmem:[#allocation5] sm:$0xff]
      %v1152 = vld [vmem:[#allocation5 + $0x8] sm:$0xff]
      %v1153 = vld [vmem:[#allocation5 + $0x10] sm:$0xff]
      %v1154 = vld [vmem:[#allocation5 + $0x18] sm:$0xff]
      %v1155 = vld [vmem:[#allocation5 + $0x20] sm:$0xff]
      %v1156 = vld [vmem:[#allocation5 + $0x28] sm:$0xff]
      %v1157 = vld [vmem:[#allocation5 + $0x30] sm:$0xff]
      %v1158 = vld [vmem:[#allocation5 + $0x38] sm:$0xff]
      %v1159 = vld [vmem:[#allocation5 + $0x40] sm:$0xff]
      %v1160 = vld [vmem:[#allocation5 + $0x48] sm:$0xff]
      %v1161 = vld [vmem:[#allocation5 + $0x50] sm:$0xff]
      %v1162 = vld [vmem:[#allocation5 + $0x58] sm:$0xff]
      %v1163 = vld [vmem:[#allocation5 + $0x60] sm:$0xff]
      %v1164 = vld [vmem:[#allocation5 + $0x68] sm:$0xff]
      %v1165 = vld [vmem:[#allocation5 + $0x70] sm:$0xff]
      %v1166 = vld [vmem:[#allocation5 + $0x78] sm:$0xff]
      %v1167 = vld [vmem:[#allocation5 + $0x80] sm:$0xff]
      %v1168 = vld [vmem:[#allocation5 + $0x88] sm:$0xff]
      %v1169 = vld [vmem:[#allocation5 + $0x90] sm:$0xff]
      %v1170 = vld [vmem:[#allocation5 + $0x98] sm:$0xff]
      %v1171 = vld [vmem:[#allocation5 + $0xa0] sm:$0xff]
      %v1172 = vld [vmem:[#allocation5 + $0xa8] sm:$0xff]
      %v1173 = vld [vmem:[#allocation5 + $0xb0] sm:$0xff]
      %v1174 = vld [vmem:[#allocation5 + $0xb8] sm:$0xff]
      %v1175 = vld [vmem:[%s3] sm:$0xff]
      %v1176 = vld [vmem:[%s3 + $0x8] sm:$0xff]
      %v1177 = vld [vmem:[%s3 + $0x10] sm:$0xff]
      %v1178 = vld [vmem:[%s3 + $0x18] sm:$0xff]
      %v1179 = vld [vmem:[%s3 + $0x20] sm:$0xff]
      %v1180 = vld [vmem:[%s3 + $0x28] sm:$0xff]
      %v1181 = vld [vmem:[%s3 + $0x30] sm:$0xff]
      %v1182 = vld [vmem:[%s3 + $0x38] sm:$0xff]
      %v1183 = vld [vmem:[%s3 + $0x40] sm:$0xff]
      %v1184 = vld [vmem:[%s3 + $0x48] sm:$0xff]
      %v1185 = vld [vmem:[%s3 + $0x50] sm:$0xff]
      %v1186 = vld [vmem:[%s3 + $0x58] sm:$0xff]
      %v1187 = vld [vmem:[%s3 + $0x60] sm:$0xff]
      %v1188 = vld [vmem:[%s3 + $0x68] sm:$0xff]
      %v1189 = vld [vmem:[%s3 + $0x70] sm:$0xff]
      %v1190 = vld [vmem:[%s3 + $0x78] sm:$0xff]
      %v1191 = vld [vmem:[%s3 + $0x80] sm:$0xff]
      %v1192 = vld [vmem:[%s3 + $0x88] sm:$0xff]
      %v1193 = vld [vmem:[%s3 + $0x90] sm:$0xff]
      %v1194 = vld [vmem:[%s3 + $0x98] sm:$0xff]
      %v1195 = vld [vmem:[%s3 + $0xa0] sm:$0xff]
      %v1196 = vld [vmem:[%s3 + $0xa8] sm:$0xff]
      %v1197 = vld [vmem:[%s3 + $0xb0] sm:$0xff]
      %v1198 = vld [vmem:[%s3 + $0xb8] sm:$0xff]
      %v1199 = vld [vmem:[%s3 + $0xc0] sm:$0xff]
      %v1200 = vld [vmem:[%s3 + $0xc8] sm:$0xff]
      %v1201 = vld [vmem:[%s3 + $0xd0] sm:$0xff]
      %v1202 = vld [vmem:[%s3 + $0xd8] sm:$0xff]
      %v1203 = vld [vmem:[%s3 + $0xe0] sm:$0xff]
      %v1204 = vld [vmem:[%s3 + $0xe8] sm:$0xff]
      %v1205 = vld [vmem:[%s3 + $0xf0] sm:$0xff]
      %v1206 = vld [vmem:[%s3 + $0xf8] sm:$0xff]
      %v1207 = vld [vmem:[%s3 + $0x100] sm:$0xff]
      %v1208 = vld [vmem:[%s3 + $0x108] sm:$0xff]
      %v1209 = vld [vmem:[%s3 + $0x110] sm:$0xff]
      %v1210 = vld [vmem:[%s3 + $0x118] sm:$0xff]
      %v1211 = vld [vmem:[%s4] sm:$0x1]
      %v1213 = vperm.slane %v1211, 0
      %v1216 = vsel %vm774, %v1153, 0
      %v1219 = vsel %vm774, %v1156, 0
      %v1222 = vsel %vm774, %v1159, 0
      %v1225 = vsel %vm774, %v1162, 0
      %v1228 = vsel %vm774, %v1165, 0
      %v1231 = vsel %vm774, %v1168, 0
      %v1234 = vsel %vm774, %v1171, 0
      %v1237 = vsel %vm774, %v1174, 0
      %1239 = vmatpush.msra.mxu0 %v1190
      %1240 = vmatpush.msra.mxu0 %v1189
      %1241 = vmatpush.msra.mxu0 %v1188
      %1242 = vmatpush.msra.mxu0 %v1187
      %1243 = vmatpush.msra.mxu0 %v1186
      %1244 = vmatpush.msra.mxu0 %v1185
      %1245 = vmatpush.msra.mxu0 %v1184
      %1246 = vmatpush.msra.mxu0 %v1183
      %1247 = vmatpush.msra.mxu0 %v1182
      %1248 = vmatpush.msra.mxu0 %v1181
      %1249 = vmatpush.msra.mxu0 %v1180
      %1250 = vmatpush.msra.mxu0 %v1179
      %1251 = vmatpush.msra.mxu0 %v1178
      %1252 = vmatpush.msra.mxu0 %v1177
      %1253 = vmatpush.msra.mxu0 %v1176
      %1254 = vmatpush.msra.mxu0 %v1175
      %1255 = vmatmul.f32.gmra.mxu0 %v1151
      %v1256 = vpop.f32.mrf.mxu0
      %v1257 = vadd.f32 %v1213, %v1256
      %1258 = vmatmul.f32.gmra.mxu0 %v1154
      %v1259 = vpop.f32.mrf.mxu0
      %v1260 = vadd.f32 %v1213, %v1259
      %1261 = vmatmul.f32.gmra.mxu0 %v1157
      %v1262 = vpop.f32.mrf.mxu0
      %v1263 = vadd.f32 %v1213, %v1262
      %1264 = vmatmul.f32.gmra.mxu0 %v1160
      %v1265 = vpop.f32.mrf.mxu0
      %v1266 = vadd.f32 %v1213, %v1265
      %1267 = vmatmul.f32.gmra.mxu0 %v1163
      %v1268 = vpop.f32.mrf.mxu0
      %v1269 = vadd.f32 %v1213, %v1268
      %1270 = vmatmul.f32.gmra.mxu0 %v1166
      %v1271 = vpop.f32.mrf.mxu0
      %v1272 = vadd.f32 %v1213, %v1271
      %1273 = vmatmul.f32.gmra.mxu0 %v1169
      %v1274 = vpop.f32.mrf.mxu0
      %v1275 = vadd.f32 %v1213, %v1274
      %1276 = vmatmul.f32.gmra.mxu0 %v1172
      %v1277 = vpop.f32.mrf.mxu0
      %v1278 = vadd.f32 %v1213, %v1277
      %1279 = vdwg.mxu0
      %1280 = vmatpush.msra.mxu0 %v1206
      %1281 = vmatpush.msra.mxu0 %v1205
      %1282 = vmatpush.msra.mxu0 %v1204
      %1283 = vmatpush.msra.mxu0 %v1203
      %1284 = vmatpush.msra.mxu0 %v1202
      %1285 = vmatpush.msra.mxu0 %v1201
      %1286 = vmatpush.msra.mxu0 %v1200
      %1287 = vmatpush.msra.mxu0 %v1199
      %1288 = vmatpush.msra.mxu0 %v1198
      %1289 = vmatpush.msra.mxu0 %v1197
      %1290 = vmatpush.msra.mxu0 %v1196
      %1291 = vmatpush.msra.mxu0 %v1195
      %1292 = vmatpush.msra.mxu0 %v1194
      %1293 = vmatpush.msra.mxu0 %v1193
      %1294 = vmatpush.msra.mxu0 %v1192
      %1295 = vmatpush.msra.mxu0 %v1191
      %1296 = vmatmul.f32.gmra.mxu0 %v1152
      %v1297 = vpop.f32.mrf.mxu0
      %v1298 = vadd.f32 %v1257, %v1297
      %1299 = vmatmul.f32.gmra.mxu0 %v1155
      %v1300 = vpop.f32.mrf.mxu0
      %v1301 = vadd.f32 %v1260, %v1300
      %1302 = vmatmul.f32.gmra.mxu0 %v1158
      %v1303 = vpop.f32.mrf.mxu0
      %v1304 = vadd.f32 %v1263, %v1303
      %1305 = vmatmul.f32.gmra.mxu0 %v1161
      %v1306 = vpop.f32.mrf.mxu0
      %v1307 = vadd.f32 %v1266, %v1306
      %1308 = vmatmul.f32.gmra.mxu0 %v1164
      %v1309 = vpop.f32.mrf.mxu0
      %v1310 = vadd.f32 %v1269, %v1309
      %1311 = vmatmul.f32.gmra.mxu0 %v1167
      %v1312 = vpop.f32.mrf.mxu0
      %v1313 = vadd.f32 %v1272, %v1312
      %1314 = vmatmul.f32.gmra.mxu0 %v1170
      %v1315 = vpop.f32.mrf.mxu0
      %v1316 = vadd.f32 %v1275, %v1315
      %1317 = vmatmul.f32.gmra.mxu0 %v1173
      %v1318 = vpop.f32.mrf.mxu0
      %v1319 = vadd.f32 %v1278, %v1318
      %1320 = vdwg.mxu0
      %1321 = vmatpush.msra.mxu0 0.0
      %1322 = vmatpush.msra.mxu0 0.0
      %1323 = vmatpush.msra.mxu0 0.0
      %1324 = vmatpush.msra.mxu0 0.0
      %1325 = vmatpush.msra.mxu0 0.0
      %1326 = vmatpush.msra.mxu0 0.0
      %1327 = vmatpush.msra.mxu0 0.0
      %1328 = vmatpush.msra.mxu0 0.0
      %1329 = vmatpush.msra.mxu0 0.0
      %1330 = vmatpush.msra.mxu0 0.0
      %1331 = vmatpush.msra.mxu0 0.0
      %1332 = vmatpush.msra.mxu0 0.0
      %1333 = vmatpush.msra.mxu0 %v1210
      %1334 = vmatpush.msra.mxu0 %v1209
      %1335 = vmatpush.msra.mxu0 %v1208
      %1336 = vmatpush.msra.mxu0 %v1207
      %1337 = vmatmul.f32.gmra.mxu0 %v1216
      %v1338 = vpop.f32.mrf.mxu0
      %v1339 = vadd.f32 %v1298, %v1338
      %1340 = vmatmul.f32.gmra.mxu0 %v1219
      %v1341 = vpop.f32.mrf.mxu0
      %v1342 = vadd.f32 %v1301, %v1341
      %1343 = vmatmul.f32.gmra.mxu0 %v1222
      %v1344 = vpop.f32.mrf.mxu0
      %v1345 = vadd.f32 %v1304, %v1344
      %1346 = vmatmul.f32.gmra.mxu0 %v1225
      %v1347 = vpop.f32.mrf.mxu0
      %v1348 = vadd.f32 %v1307, %v1347
      %1349 = vmatmul.f32.gmra.mxu0 %v1228
      %v1350 = vpop.f32.mrf.mxu0
      %v1351 = vadd.f32 %v1310, %v1350
      %1352 = vmatmul.f32.gmra.mxu0 %v1231
      %v1353 = vpop.f32.mrf.mxu0
      %v1354 = vadd.f32 %v1313, %v1353
      %1355 = vmatmul.f32.gmra.mxu0 %v1234
      %v1356 = vpop.f32.mrf.mxu0
      %v1357 = vadd.f32 %v1316, %v1356
      %1358 = vmatmul.f32.gmra.mxu0 %v1237
      %v1359 = vpop.f32.mrf.mxu0
      %v1360 = vadd.f32 %v1319, %v1359
      %1361 = vdwg.mxu0
      %v1362 = vmax.f32 %v1339, 0.0
      %v1363 = vmax.f32 %v1342, 0.0
      %v1364 = vmax.f32 %v1345, 0.0
      %v1365 = vmax.f32 %v1348, 0.0
      %v1366 = vmax.f32 %v1351, 0.0
      %v1367 = vmax.f32 %v1354, 0.0
      %v1368 = vmax.f32 %v1357, 0.0
      %v1369 = vmax.f32 %v1360, 0.0
      %1370 = vst.msk [vmem:[%s224] sm:$0xff] %vm774, %v1362
      %1371 = vst.msk [vmem:[%s224 + $0x8] sm:$0xff] %vm774, %v1363
      %1372 = vst.msk [vmem:[%s224 + $0x10] sm:$0xff] %vm774, %v1364
      %1373 = vst.msk [vmem:[%s224 + $0x18] sm:$0xff] %vm774, %v1365
      %1374 = vst.msk [vmem:[%s224 + $0x20] sm:$0xff] %vm774, %v1366
      %1375 = vst.msk [vmem:[%s224 + $0x28] sm:$0xff] %vm774, %v1367
      %1376 = vst.msk [vmem:[%s224 + $0x30] sm:$0xff] %vm774, %v1368
      %1377 = vst.msk [vmem:[%s224 + $0x38] sm:$0xff] %vm774, %v1369
      %p1378 = scmp.lt.s32.totalorder %s16, 1
      %s1379 = scalar_select %p1378, %s16, 1
      %s1380 = smul.addr %s1379, 8
      %s1381 = smul.addr %s1380, 8
      %s1382 = scalar_lea.vmem %s5, %s1381
      // Predicated region
      $region41: #{tpu_custom_call.1} parent=39 // pred_check
        %p1383 = pneg %p144
      $region42: #{tpu_custom_call.1} parent=39 // pred_check_branch
        %1385 = sbr.rel (%p1383) target = $region44
      $region43: #{tpu_custom_call.1} parent=39 // pred_region
        _
      $region44: #{tpu_custom_call.1} parent=39 // pred_fallthru
        _
    $region40: #{tpu_custom_call.1} parent=5 // pred_fallthru
      _
    %p1386 = scmp.le.s32.totalorder 2, %s11
    // Predicated region
    $region45: #{tpu_custom_call.1} parent=5 // pred_check
      %p1387 = pneg %p1386
    $region46: #{tpu_custom_call.1} parent=5 // pred_check_branch
      %1389 = sbr.rel (%p1387) target = $region48
    $region47: #{tpu_custom_call.1} parent=5 // pred_region
      %s1390 = ssub.s32 %s11, 2
      // Predicated region
      $region49: #{tpu_custom_call.1} parent=47 // pred_check
        %p1391 = pneg %p150
      $region50: #{tpu_custom_call.1} parent=47 // pred_check_branch
        %1393 = sbr.rel (%p1391) target = $region52
      $region51: #{tpu_custom_call.1} parent=47 // pred_region
        %p1394 = scmp.lt.s32.totalorder %s17, 1
        %s1395 = scalar_select %p1394, %s17, 1
        %s1396 = smul.addr %s1395, 8
        %s1397 = smul.addr %s1396, 8
        %s1398 = scalar_lea.vmem %s5, %s1397
      $region52: #{tpu_custom_call.1} parent=47 // pred_fallthru
        _
    $region48: #{tpu_custom_call.1} parent=5 // pred_fallthru
      _
  $region6: #{tpu_custom_call.1} parent=0 // loop_footer
    %s15 = sadd.s32 1, %s11
  $region7: #{tpu_custom_call.1} parent=0 // loop_footer_branch
    %10 = sbr.rel target = $region3
  $region8: #{tpu_custom_call.1} parent=0 // loop_exit
    _

</llo_original>
